<compile_context>
chip_gen: v7x
topology: tpu7x:2x2x1
jax: 0.10.0
libtpu: 0.0.40
codegen_flags: <defaults>
</compile_context>

<pallas_src>
import functools

import jax
import jax.numpy as jnp
from jax import lax
from jax.experimental import pallas as pl
from jax.experimental.pallas import tpu as pltpu

EPS = 1e-5

# MXU input dtype.  bf16 inputs + f32 accumulation (preferred_element_type)
# give the native MXU rate on v6e/v7x (and the bf16 path on v5e) while all
# elementwise math stays f32.
MXU_DTYPE = jnp.bfloat16

VMEM_LIMIT_BYTES = 32 * 1024 * 1024

# 3x3 taps, t = kh*3 + kw  <->  (dh, dw) = (kh-1, kw-1); t == 4 is the center.
_TAPS = tuple((dh, dw) for dh in (-1, 0, 1) for dw in (-1, 0, 1))


def _vmem():
    return pl.BlockSpec(memory_space=pltpu.MemorySpace.VMEM)


# --------------------------- in-kernel helpers -------------------------------


def _bn_relu(x, g_ref, b_ref):
    """Train-mode BatchNorm (biased batch stats over the lane axis) + ReLU.
    x: (C, P) f32; g_ref/b_ref: (C, 1) VMEM refs."""
    cnt = float(x.shape[1])
    s1 = jnp.sum(x, axis=1, keepdims=True)
    s2 = jnp.sum(x * x, axis=1, keepdims=True)        # one-pass stats
    m = s1 * (1.0 / cnt)
    var = jnp.maximum(s2 * (1.0 / cnt) - m * m, 0.0)
    scale = lax.rsqrt(var + EPS) * g_ref[...]
    return jnp.maximum((x - m) * scale + b_ref[...], 0.0)


def _conv3x3(act, w_ref, masks, w_img, tap_ref):
    """3x3, stride-1, pad-1 conv as ONE stacked-K MXU matmul.

    act:     (Cin, P) f32 flat lane-dense activations.
    w_ref:   (M, 9*Cin) weight ref in MXU_DTYPE, K index = tap*Cin + ci.
    masks:   (8, P) f32 0/1 boundary masks for the non-center taps (tap order).
    tap_ref: (9*Cin, P) f32 VMEM scratch holding the stacked shifted taps.
    Returns (M, P) f32.
    """
    cin = act.shape[0]
    P = act.shape[1]
    for t, (dh, dw) in enumerate(_TAPS):
        s = dh * w_img + dw                   # flat-pixel shift of this tap
        tap = act if s == 0 else pltpu.roll(act, shift=(-s) % P, axis=1)
        if t != 4:                            # emulate zero padding at borders
            mrow = t if t < 4 else t - 1
            tap = tap * masks[mrow:mrow + 1, :]
        tap_ref[pl.ds(t * cin, cin), :] = tap
    return jnp.dot(w_ref[...], tap_ref[...].astype(MXU_DTYPE),
                   preferred_element_type=jnp.float32)


# ----------------------------- kernels --------------------------------------


def _fused_block_kernel(x_ref, m_ref, g1_ref, b1_ref, w1_ref, g2_ref, b2_ref,
                        w2_ref, o_ref, tap_ref, *, w_img):
    """Whole stride-1, equal-in/out BasicBlock in a single kernel."""
    masks = m_ref[...]
    x = x_ref[...]
    a1 = _bn_relu(x, g1_ref, b1_ref)
    h = _conv3x3(a1, w1_ref, masks, w_img, tap_ref)
    a2 = _bn_relu(h, g2_ref, b2_ref)
    # TODO(synk): dropout between relu2 and conv2 for dropRate > 0 (default 0.0).
    o_ref[...] = x + _conv3x3(a2, w2_ref, masks, w_img, tap_ref)


def _make_proj_kernel(w_img, wo_img, stride):
    """Whole projection (possibly strided) BasicBlock in a single kernel:
    bn1+relu -> [conv1 | 1x1 shortcut] as one fused matmul -> stride subsample
    (0/1 selection matmul, stays in VMEM) -> bn2+relu -> conv2 -> residual."""

    def kernel(x_ref, mf_ref, ms_ref, g1_ref, b1_ref, w1sc_ref,
               g2_ref, b2_ref, w2_ref, *rest):
        if stride > 1:
            s_ref = rest[0]
            rest = rest[1:]
        o_ref, tap1_ref, tap2_ref = rest
        cout = o_ref.shape[0]

        a1 = _bn_relu(x_ref[...], g1_ref, b1_ref)
        # conv1 and the 1x1 shortcut share one matmul: rows [:cout] are the
        # 3x3 conv, rows [cout:] are wsc placed in the center-tap columns.
        hsc = _conv3x3(a1, w1sc_ref, mf_ref[...], w_img, tap1_ref)
        if stride > 1:
            # Strided conv == stride-1 conv sampled at multiples of `stride`;
            # the selection matmul keeps the gather on the MXU and in VMEM.
            # TODO(synk): gather only the strided source lanes per tap instead
            #             of computing the full-res conv1 (4x less MXU work).
            hsc = jnp.dot(hsc, s_ref[...], preferred_element_type=jnp.float32)
        h_s = hsc[:cout]
        sc_s = hsc[cout:]
        a2 = _bn_relu(h_s, g2_ref, b2_ref)
        # TODO(synk): dropout between relu2 and conv2 for dropRate > 0.
        o_ref[...] = sc_s + _conv3x3(a2, w2_ref, ms_ref[...], wo_img, tap2_ref)

    return kernel


# --------------------------- pallas_call wrappers ----------------------------


def _call_fused_block(x_flat, masks, p, w_img):
    c, P = x_flat.shape
    kernel = functools.partial(_fused_block_kernel, w_img=w_img)
    flops = 2 * (2 * 9 * c * c * P) + 10 * c * P
    bytes_acc = 4 * (2 * c * P + 8 * P + 4 * c) + 2 * (2 * 9 * c * c)
    return pl.pallas_call(
        kernel,
        out_shape=jax.ShapeDtypeStruct((c, P), jnp.float32),
        in_specs=[_vmem()] * 8,
        out_specs=_vmem(),
        scratch_shapes=[pltpu.VMEM((9 * c, P), jnp.float32)],
        input_output_aliases={0: 0},     # residual output reuses x's HBM buffer
        compiler_params=pltpu.CompilerParams(
            vmem_limit_bytes=VMEM_LIMIT_BYTES),
        cost_estimate=pl.CostEstimate(flops=flops, transcendentals=2 * c,
                                      bytes_accessed=bytes_acc),
    )(x_flat, masks, p["g1"], p["b1"], p["w1"], p["g2"], p["b2"], p["w2"])


def _call_proj_block(x_flat, masks_f, masks_s, sub_mat, p, w_img, wo_img,
                     stride):
    cin, P = x_flat.shape
    cout = p["w2"].shape[0]
    Ps = masks_s.shape[1]
    kernel = _make_proj_kernel(w_img, wo_img, stride)
    args = [x_flat, masks_f, masks_s, p["g1"], p["b1"], p["w1sc"],
            p["g2"], p["b2"], p["w2"]]
    if stride > 1:
        args.append(sub_mat)
    flops = (2 * (2 * cout) * (9 * cin) * P + 2 * (2 * cout) * P * Ps
             + 2 * cout * (9 * cout) * Ps + 12 * cout * Ps)
    bytes_acc = 4 * (cin * P + 8 * P + 8 * Ps + P * Ps + cout * Ps)
    return pl.pallas_call(
        kernel,
        out_shape=jax.ShapeDtypeStruct((cout, Ps), jnp.float32),
        in_specs=[_vmem()] * len(args),
        out_specs=_vmem(),
        scratch_shapes=[pltpu.VMEM((9 * cin, P), jnp.float32),
                        pltpu.VMEM((9 * cout, Ps), jnp.float32)],
        compiler_params=pltpu.CompilerParams(
            vmem_limit_bytes=VMEM_LIMIT_BYTES),
        cost_estimate=pl.CostEstimate(flops=flops, transcendentals=cin + cout,
                                      bytes_accessed=bytes_acc),
    )(*args)


# ------------------------------- glue ----------------------------------------


def _tap_masks(n_img, h_img, w_img):
    """(8, P) f32 0/1 masks for the 8 non-center taps (tap order, center
    skipped): 1 where the shifted source pixel lies inside the (unpadded)
    image -> emulates the conv's zero padding.  Static -> constant-folded."""
    P = n_img * h_img * w_img
    p = jnp.arange(P, dtype=jnp.int32)
    hw = p % (h_img * w_img)
    rr = hw // w_img
    cc = hw % w_img
    rows = []
    for dh, dw in _TAPS:
        if dh == 0 and dw == 0:
            continue
        ok = ((rr + dh >= 0) & (rr + dh < h_img)
              & (cc + dw >= 0) & (cc + dw < w_img))
        rows.append(ok.astype(jnp.float32))
    return jnp.stack(rows, axis=0)


def _subsample_matrix(n_img, h_img, w_img, ho, wo, stride):
    """(P, Ps) f32 0/1 selection matrix: column q picks the flat source pixel
    (n, stride*r, stride*c) for output pixel q = (n, r, c)."""
    P = n_img * h_img * w_img
    Ps = n_img * ho * wo
    q = jnp.arange(Ps, dtype=jnp.int32)
    n = q // (ho * wo)
    rem = q % (ho * wo)
    r = rem // wo
    c = rem % wo
    src = n * (h_img * w_img) + (stride * r) * w_img + stride * c
    return (jnp.arange(P, dtype=jnp.int32)[:, None] == src[None, :]
            ).astype(jnp.float32)


def _w3x3_stacked(w):
    """(Cout, Cin, 3, 3) PyTorch conv weight -> (Cout, 9*Cin), K = tap*Cin+ci."""
    co, ci = w.shape[0], w.shape[1]
    return jnp.transpose(w, (0, 2, 3, 1)).reshape(co, 9 * ci)


def prepare_network_block_params(params_list):
    """One-time re-layout (call OUTSIDE the jitted forward): gamma/beta as
    (C,1) f32; 3x3 weights stacked to (Cout, 9*Cin) and pre-cast to MXU_DTYPE;
    the 1x1 shortcut fused as extra output rows of conv1's weight (nonzero
    only in the center-tap columns)."""
    prepped = []
    for p in params_list:
        q = {"g1": p["g1"].reshape(-1, 1).astype(jnp.float32),
             "b1": p["b1"].reshape(-1, 1).astype(jnp.float32),
             "g2": p["g2"].reshape(-1, 1).astype(jnp.float32),
             "b2": p["b2"].reshape(-1, 1).astype(jnp.float32),
             "w2": _w3x3_stacked(p["w2"]).astype(MXU_DTYPE)}
        w1 = _w3x3_stacked(p["w1"])
        if "wsc" in p:
            co, ci = p["w1"].shape[0], p["w1"].shape[1]
            wsc = p["wsc"].reshape(co, ci)
            wsc_rows = jnp.zeros((co, 9 * ci), jnp.float32)
            wsc_rows = wsc_rows.at[:, 4 * ci:5 * ci].set(wsc)
            q["w1sc"] = jnp.concatenate([w1, wsc_rows], axis=0).astype(MXU_DTYPE)
        else:
            q["w1"] = w1.astype(MXU_DTYPE)
        prepped.append(q)
    return prepped


def network_block_forward(x, prepped_params, in_planes, out_planes, stride):
    """x: (N, Cin, H, W) NCHW -> (N, Cout, H', W') NCHW."""
    del in_planes                              # block type inferred from params
    n_img, c, h_img, w_img = x.shape
    # layout plumbing: NCHW -> lane-dense (C, N*H*W)
    x_flat = jnp.transpose(x, (1, 0, 2, 3)).reshape(c, n_img * h_img * w_img)
    masks = _tap_masks(n_img, h_img, w_img)
    for i, p in enumerate(prepped_params):
        s = stride if i == 0 else 1
        if "w1sc" in p:                        # projection (possibly strided)
            ho = (h_img - 1) // s + 1
            wo = (w_img - 1) // s + 1
            masks_s = masks if s == 1 else _tap_masks(n_img, ho, wo)
            sub = None if s == 1 else _subsample_matrix(n_img, h_img, w_img,
                                                        ho, wo, s)
            x_flat = _call_proj_block(x_flat, masks, masks_s, sub, p,
                                      w_img, wo, s)
            h_img, w_img, masks = ho, wo, masks_s
        else:                                  # identity-shortcut block
            if s != 1:
                raise NotImplementedError("identity shortcut with stride > 1")
            x_flat = _call_fused_block(x_flat, masks, p, w_img)
    # TODO(synk): for real WRN sizes add a per-image grid (two-pass BN stats +
    #             normalize/conv pass) so the working set fits v7x's 64 MiB
    #             VMEM and both TensorCores are used; gridless whole-array
    #             VMEM residency is only appropriate at these toy shapes.
    return jnp.transpose(
        x_flat.reshape(out_planes, n_img, h_img, w_img), (1, 0, 2, 3))


# -------------------------- params & reference -------------------------------


def init_network_block_params(key, nb_layers, in_planes, out_planes):
    params = []
    for i in range(nb_layers):
        cin = in_planes if i == 0 else out_planes
        key, *ks = jax.random.split(key, 8)
        p = {"g1": 1.0 + 0.1 * jax.random.normal(ks[0], (cin,), jnp.float32),
             "b1": 0.1 * jax.random.normal(ks[1], (cin,), jnp.float32),
             "w1": 0.2 * jax.random.normal(ks[2], (out_planes, cin, 3, 3), jnp.float32),
             "g2": 1.0 + 0.1 * jax.random.normal(ks[3], (out_planes,), jnp.float32),
             "b2": 0.1 * jax.random.normal(ks[4], (out_planes,), jnp.float32),
             "w2": 0.2 * jax.random.normal(ks[5], (out_planes, out_planes, 3, 3), jnp.float32)}
        if cin != out_planes:
            p["wsc"] = 0.2 * jax.random.normal(ks[6], (out_planes, cin, 1, 1), jnp.float32)
        params.append(p)
    return params


def _network_block_ref(x, params_list, in_planes, out_planes, stride):
    """Pure-JAX/XLA reference of the same module (train-mode BN)."""
    def bn_relu(z, g, b):
        m = z.mean(axis=(0, 2, 3), keepdims=True)
        v = z.var(axis=(0, 2, 3), keepdims=True)          # biased
        zn = (z - m) * lax.rsqrt(v + EPS)
        return jnp.maximum(zn * g.reshape(1, -1, 1, 1) + b.reshape(1, -1, 1, 1), 0.0)

    def conv(z, w, s, pad):
        return lax.conv_general_dilated(z, w, (s, s), [(pad, pad), (pad, pad)],
                                        dimension_numbers=("NCHW", "OIHW", "NCHW"))

    for i, p in enumerate(params_list):
        s = stride if i == 0 else 1
        cin = in_planes if i == 0 else out_planes
        a1 = bn_relu(x, p["g1"], p["b1"])
        h = conv(a1, p["w1"], s, 1)
        a2 = bn_relu(h, p["g2"], p["b2"])
        y = conv(a2, p["w2"], 1, 1)
        sc = x if cin == out_planes else conv(a1, p["wsc"], s, 0)
        x = sc + y
    return x


if __name__ == "__main__":
    # NetworkBlock(nb_layers=2, in_planes=4, out_planes=8, block=BasicBlock,
    #              stride=2, dropRate=0.0), train-mode BN, dropout no-op.
    nb_layers, in_planes, out_planes, stride = 2, 4, 8, 2
    N, H, W = 2, 16, 16

    key = jax.random.PRNGKey(0)
    key_x, key_p = jax.random.split(key)
    x = jax.random.normal(key_x, (N, in_planes, H, W), jnp.float32)
    params = init_network_block_params(key_p, nb_layers, in_planes, out_planes)
    prepped = prepare_network_block_params(params)   # one-time weight re-layout

    fwd = jax.jit(functools.partial(network_block_forward, in_planes=in_planes,
                                    out_planes=out_planes, stride=stride))
    out = jax.block_until_ready(fwd(x, prepped))

    assert out.shape == (N, out_planes, H // stride, W // stride), out.shape
    assert bool(jnp.all(jnp.isfinite(out)))

    # Sanity check vs a pure-JAX reference.  Loose tolerance: the kernel uses
    # bf16 MXU inputs (f32 accumulation) and XLA's conv also takes a
    # reduced-precision f32 path on TPU.
    ref = _network_block_ref(x, params, in_planes, out_planes, stride)
    rel = float(jnp.max(jnp.abs(out - ref)) / (jnp.max(jnp.abs(ref)) + 1e-6))
    assert rel < 5e-2, f"mismatch vs reference: rel={rel}"
    print("KERNEL_OK")
</pallas_src>

<mosaic_0001>
module attributes {stable_mosaic.version = 11 : i64} {
  func.func @_fused_block_kernel(%arg0: memref<8x128xf32, #tpu.memory_space<vmem>>, %arg1: memref<8x128xf32, #tpu.memory_space<vmem>>, %arg2: memref<8x1xf32, #tpu.memory_space<vmem>>, %arg3: memref<8x1xf32, #tpu.memory_space<vmem>>, %arg4: memref<8x72xbf16, #tpu.memory_space<vmem>>, %arg5: memref<8x1xf32, #tpu.memory_space<vmem>>, %arg6: memref<8x1xf32, #tpu.memory_space<vmem>>, %arg7: memref<8x72xbf16, #tpu.memory_space<vmem>>, %arg8: memref<8x128xf32, #tpu.memory_space<vmem>>, %arg9: memref<72x128xf32, #tpu.memory_space<vmem>>) attributes {dimension_semantics = [], scalar_prefetch = 0 : i64, scratch_operands = 1 : i64, tpu.core_type = #tpu.core_type<tc>} {
    %c0 = arith.constant 0 : index
    %c0_0 = arith.constant 0 : index
    %0 = vector.load %arg1[%c0, %c0_0] : memref<8x128xf32, #tpu.memory_space<vmem>>, vector<8x128xf32>
    %c0_1 = arith.constant 0 : index
    %c0_2 = arith.constant 0 : index
    %1 = vector.load %arg0[%c0_1, %c0_2] : memref<8x128xf32, #tpu.memory_space<vmem>>, vector<8x128xf32>
    %cst = arith.constant dense<0.000000e+00> : vector<8xf32>
    %2 = vector.multi_reduction <add>, %1, %cst [1] : vector<8x128xf32> to vector<8xf32>
    %3 = vector.shape_cast %2 : vector<8xf32> to vector<8x1xf32>
    %4 = arith.mulf %1, %1 : vector<8x128xf32>
    %cst_3 = arith.constant dense<0.000000e+00> : vector<8xf32>
    %5 = vector.multi_reduction <add>, %4, %cst_3 [1] : vector<8x128xf32> to vector<8xf32>
    %6 = vector.shape_cast %5 : vector<8xf32> to vector<8x1xf32>
    %cst_4 = arith.constant 7.812500e-03 : f32
    %7 = vector.broadcast %cst_4 : f32 to vector<8x1xf32>
    %8 = arith.mulf %3, %7 : vector<8x1xf32>
    %cst_5 = arith.constant 7.812500e-03 : f32
    %9 = vector.broadcast %cst_5 : f32 to vector<8x1xf32>
    %10 = arith.mulf %6, %9 : vector<8x1xf32>
    %11 = arith.mulf %8, %8 : vector<8x1xf32>
    %12 = arith.subf %10, %11 : vector<8x1xf32>
    %cst_6 = arith.constant 0.000000e+00 : f32
    %13 = vector.broadcast %cst_6 : f32 to vector<8x1xf32>
    %14 = arith.maximumf %12, %13 : vector<8x1xf32>
    %cst_7 = arith.constant 9.99999974E-6 : f32
    %15 = vector.broadcast %cst_7 : f32 to vector<8x1xf32>
    %16 = arith.addf %14, %15 : vector<8x1xf32>
    %17 = math.rsqrt %16 : vector<8x1xf32>
    %c0_8 = arith.constant 0 : index
    %c0_9 = arith.constant 0 : index
    %18 = vector.load %arg2[%c0_8, %c0_9] : memref<8x1xf32, #tpu.memory_space<vmem>>, vector<8x1xf32>
    %19 = arith.mulf %17, %18 : vector<8x1xf32>
    %20 = vector.broadcast %8 : vector<8x1xf32> to vector<8x128xf32>
    %21 = arith.subf %1, %20 : vector<8x128xf32>
    %22 = vector.broadcast %19 : vector<8x1xf32> to vector<8x128xf32>
    %23 = arith.mulf %21, %22 : vector<8x128xf32>
    %c0_10 = arith.constant 0 : index
    %c0_11 = arith.constant 0 : index
    %24 = vector.load %arg3[%c0_10, %c0_11] : memref<8x1xf32, #tpu.memory_space<vmem>>, vector<8x1xf32>
    %25 = vector.broadcast %24 : vector<8x1xf32> to vector<8x128xf32>
    %26 = arith.addf %23, %25 : vector<8x128xf32>
    %cst_12 = arith.constant 0.000000e+00 : f32
    %27 = vector.broadcast %cst_12 : f32 to vector<8x128xf32>
    %28 = arith.maximumf %26, %27 : vector<8x128xf32>
    %c9_i32 = arith.constant 9 : i32
    %29 = tpu.dynamic_rotate %28 by %c9_i32 dim 1 : vector<8x128xf32>, i32 -> vector<8x128xf32>
    %30 = vector.extract_strided_slice %0 {offsets = [0, 0], sizes = [1, 128], strides = [1, 1]} : vector<8x128xf32> to vector<1x128xf32>
    %31 = vector.broadcast %30 : vector<1x128xf32> to vector<8x128xf32>
    %32 = arith.mulf %29, %31 : vector<8x128xf32>
    %c0_13 = arith.constant 0 : index
    %c0_14 = arith.constant 0 : index
    %33 = vector.load %arg9[%c0_13, %c0_14] : memref<72x128xf32, #tpu.memory_space<vmem>>, vector<8x128xf32>
    tpu.vector_store %arg9[%c0_13, %c0_14], %32 {strides = array<i32>} : memref<72x128xf32, #tpu.memory_space<vmem>>, vector<8x128xf32>,
    %c8_i32 = arith.constant 8 : i32
    %34 = tpu.dynamic_rotate %28 by %c8_i32 dim 1 : vector<8x128xf32>, i32 -> vector<8x128xf32>
    %35 = vector.extract_strided_slice %0 {offsets = [1, 0], sizes = [1, 128], strides = [1, 1]} : vector<8x128xf32> to vector<1x128xf32>
    %36 = vector.broadcast %35 : vector<1x128xf32> to vector<8x128xf32>
    %37 = arith.mulf %34, %36 : vector<8x128xf32>
    %c8 = arith.constant 8 : index
    %c0_15 = arith.constant 0 : index
    %38 = vector.load %arg9[%c8, %c0_15] : memref<72x128xf32, #tpu.memory_space<vmem>>, vector<8x128xf32>
    tpu.vector_store %arg9[%c8, %c0_15], %37 {strides = array<i32>} : memref<72x128xf32, #tpu.memory_space<vmem>>, vector<8x128xf32>,
    %c7_i32 = arith.constant 7 : i32
    %39 = tpu.dynamic_rotate %28 by %c7_i32 dim 1 : vector<8x128xf32>, i32 -> vector<8x128xf32>
    %40 = vector.extract_strided_slice %0 {offsets = [2, 0], sizes = [1, 128], strides = [1, 1]} : vector<8x128xf32> to vector<1x128xf32>
    %41 = vector.broadcast %40 : vector<1x128xf32> to vector<8x128xf32>
    %42 = arith.mulf %39, %41 : vector<8x128xf32>
    %c16 = arith.constant 16 : index
    %c0_16 = arith.constant 0 : index
    %43 = vector.load %arg9[%c16, %c0_16] : memref<72x128xf32, #tpu.memory_space<vmem>>, vector<8x128xf32>
    tpu.vector_store %arg9[%c16, %c0_16], %42 {strides = array<i32>} : memref<72x128xf32, #tpu.memory_space<vmem>>, vector<8x128xf32>,
    %c1_i32 = arith.constant 1 : i32
    %44 = tpu.dynamic_rotate %28 by %c1_i32 dim 1 : vector<8x128xf32>, i32 -> vector<8x128xf32>
    %45 = vector.extract_strided_slice %0 {offsets = [3, 0], sizes = [1, 128], strides = [1, 1]} : vector<8x128xf32> to vector<1x128xf32>
    %46 = vector.broadcast %45 : vector<1x128xf32> to vector<8x128xf32>
    %47 = arith.mulf %44, %46 : vector<8x128xf32>
    %c24 = arith.constant 24 : index
    %c0_17 = arith.constant 0 : index
    %48 = vector.load %arg9[%c24, %c0_17] : memref<72x128xf32, #tpu.memory_space<vmem>>, vector<8x128xf32>
    tpu.vector_store %arg9[%c24, %c0_17], %47 {strides = array<i32>} : memref<72x128xf32, #tpu.memory_space<vmem>>, vector<8x128xf32>,
    %c32 = arith.constant 32 : index
    %c0_18 = arith.constant 0 : index
    %49 = vector.load %arg9[%c32, %c0_18] : memref<72x128xf32, #tpu.memory_space<vmem>>, vector<8x128xf32>
    tpu.vector_store %arg9[%c32, %c0_18], %28 {strides = array<i32>} : memref<72x128xf32, #tpu.memory_space<vmem>>, vector<8x128xf32>,
    %c127_i32 = arith.constant 127 : i32
    %50 = tpu.dynamic_rotate %28 by %c127_i32 dim 1 : vector<8x128xf32>, i32 -> vector<8x128xf32>
    %51 = vector.extract_strided_slice %0 {offsets = [4, 0], sizes = [1, 128], strides = [1, 1]} : vector<8x128xf32> to vector<1x128xf32>
    %52 = vector.broadcast %51 : vector<1x128xf32> to vector<8x128xf32>
    %53 = arith.mulf %50, %52 : vector<8x128xf32>
    %c40 = arith.constant 40 : index
    %c0_19 = arith.constant 0 : index
    %54 = vector.load %arg9[%c40, %c0_19] : memref<72x128xf32, #tpu.memory_space<vmem>>, vector<8x128xf32>
    tpu.vector_store %arg9[%c40, %c0_19], %53 {strides = array<i32>} : memref<72x128xf32, #tpu.memory_space<vmem>>, vector<8x128xf32>,
    %c121_i32 = arith.constant 121 : i32
    %55 = tpu.dynamic_rotate %28 by %c121_i32 dim 1 : vector<8x128xf32>, i32 -> vector<8x128xf32>
    %56 = vector.extract_strided_slice %0 {offsets = [5, 0], sizes = [1, 128], strides = [1, 1]} : vector<8x128xf32> to vector<1x128xf32>
    %57 = vector.broadcast %56 : vector<1x128xf32> to vector<8x128xf32>
    %58 = arith.mulf %55, %57 : vector<8x128xf32>
    %c48 = arith.constant 48 : index
    %c0_20 = arith.constant 0 : index
    %59 = vector.load %arg9[%c48, %c0_20] : memref<72x128xf32, #tpu.memory_space<vmem>>, vector<8x128xf32>
    tpu.vector_store %arg9[%c48, %c0_20], %58 {strides = array<i32>} : memref<72x128xf32, #tpu.memory_space<vmem>>, vector<8x128xf32>,
    %c120_i32 = arith.constant 120 : i32
    %60 = tpu.dynamic_rotate %28 by %c120_i32 dim 1 : vector<8x128xf32>, i32 -> vector<8x128xf32>
    %61 = vector.extract_strided_slice %0 {offsets = [6, 0], sizes = [1, 128], strides = [1, 1]} : vector<8x128xf32> to vector<1x128xf32>
    %62 = vector.broadcast %61 : vector<1x128xf32> to vector<8x128xf32>
    %63 = arith.mulf %60, %62 : vector<8x128xf32>
    %c56 = arith.constant 56 : index
    %c0_21 = arith.constant 0 : index
    %64 = vector.load %arg9[%c56, %c0_21] : memref<72x128xf32, #tpu.memory_space<vmem>>, vector<8x128xf32>
    tpu.vector_store %arg9[%c56, %c0_21], %63 {strides = array<i32>} : memref<72x128xf32, #tpu.memory_space<vmem>>, vector<8x128xf32>,
    %c119_i32 = arith.constant 119 : i32
    %65 = tpu.dynamic_rotate %28 by %c119_i32 dim 1 : vector<8x128xf32>, i32 -> vector<8x128xf32>
    %66 = vector.extract_strided_slice %0 {offsets = [7, 0], sizes = [1, 128], strides = [1, 1]} : vector<8x128xf32> to vector<1x128xf32>
    %67 = vector.broadcast %66 : vector<1x128xf32> to vector<8x128xf32>
    %68 = arith.mulf %65, %67 : vector<8x128xf32>
    %c64 = arith.constant 64 : index
    %c0_22 = arith.constant 0 : index
    %69 = vector.load %arg9[%c64, %c0_22] : memref<72x128xf32, #tpu.memory_space<vmem>>, vector<8x128xf32>
    tpu.vector_store %arg9[%c64, %c0_22], %68 {strides = array<i32>} : memref<72x128xf32, #tpu.memory_space<vmem>>, vector<8x128xf32>,
    %c0_23 = arith.constant 0 : index
    %c0_24 = arith.constant 0 : index
    %70 = vector.load %arg4[%c0_23, %c0_24] : memref<8x72xbf16, #tpu.memory_space<vmem>>, vector<8x72xbf16>
    %c0_25 = arith.constant 0 : index
    %c0_26 = arith.constant 0 : index
    %71 = vector.load %arg9[%c0_25, %c0_26] : memref<72x128xf32, #tpu.memory_space<vmem>>, vector<72x128xf32>
    %72 = arith.truncf %71 : vector<72x128xf32> to vector<72x128xbf16>
    %cst_27 = arith.constant dense<0.000000e+00> : vector<8x128xf32>
    %73 = tpu.matmul %70, %72, %cst_27 {dimension_numbers = #tpu.dot_dimension_numbers<[1], [0], [0], [1], [0, 0, 1, 1], [], []>} : vector<8x72xbf16>, vector<72x128xbf16>, vector<8x128xf32> -> vector<8x128xf32>
    %cst_28 = arith.constant dense<0.000000e+00> : vector<8xf32>
    %74 = vector.multi_reduction <add>, %73, %cst_28 [1] : vector<8x128xf32> to vector<8xf32>
    %75 = vector.shape_cast %74 : vector<8xf32> to vector<8x1xf32>
    %76 = arith.mulf %73, %73 : vector<8x128xf32>
    %cst_29 = arith.constant dense<0.000000e+00> : vector<8xf32>
    %77 = vector.multi_reduction <add>, %76, %cst_29 [1] : vector<8x128xf32> to vector<8xf32>
    %78 = vector.shape_cast %77 : vector<8xf32> to vector<8x1xf32>
    %cst_30 = arith.constant 7.812500e-03 : f32
    %79 = vector.broadcast %cst_30 : f32 to vector<8x1xf32>
    %80 = arith.mulf %75, %79 : vector<8x1xf32>
    %cst_31 = arith.constant 7.812500e-03 : f32
    %81 = vector.broadcast %cst_31 : f32 to vector<8x1xf32>
    %82 = arith.mulf %78, %81 : vector<8x1xf32>
    %83 = arith.mulf %80, %80 : vector<8x1xf32>
    %84 = arith.subf %82, %83 : vector<8x1xf32>
    %cst_32 = arith.constant 0.000000e+00 : f32
    %85 = vector.broadcast %cst_32 : f32 to vector<8x1xf32>
    %86 = arith.maximumf %84, %85 : vector<8x1xf32>
    %cst_33 = arith.constant 9.99999974E-6 : f32
    %87 = vector.broadcast %cst_33 : f32 to vector<8x1xf32>
    %88 = arith.addf %86, %87 : vector<8x1xf32>
    %89 = math.rsqrt %88 : vector<8x1xf32>
    %c0_34 = arith.constant 0 : index
    %c0_35 = arith.constant 0 : index
    %90 = vector.load %arg5[%c0_34, %c0_35] : memref<8x1xf32, #tpu.memory_space<vmem>>, vector<8x1xf32>
    %91 = arith.mulf %89, %90 : vector<8x1xf32>
    %92 = vector.broadcast %80 : vector<8x1xf32> to vector<8x128xf32>
    %93 = arith.subf %73, %92 : vector<8x128xf32>
    %94 = vector.broadcast %91 : vector<8x1xf32> to vector<8x128xf32>
    %95 = arith.mulf %93, %94 : vector<8x128xf32>
    %c0_36 = arith.constant 0 : index
    %c0_37 = arith.constant 0 : index
    %96 = vector.load %arg6[%c0_36, %c0_37] : memref<8x1xf32, #tpu.memory_space<vmem>>, vector<8x1xf32>
    %97 = vector.broadcast %96 : vector<8x1xf32> to vector<8x128xf32>
    %98 = arith.addf %95, %97 : vector<8x128xf32>
    %cst_38 = arith.constant 0.000000e+00 : f32
    %99 = vector.broadcast %cst_38 : f32 to vector<8x128xf32>
    %100 = arith.maximumf %98, %99 : vector<8x128xf32>
    %c9_i32_39 = arith.constant 9 : i32
    %101 = tpu.dynamic_rotate %100 by %c9_i32_39 dim 1 : vector<8x128xf32>, i32 -> vector<8x128xf32>
    %102 = vector.extract_strided_slice %0 {offsets = [0, 0], sizes = [1, 128], strides = [1, 1]} : vector<8x128xf32> to vector<1x128xf32>
    %103 = vector.broadcast %102 : vector<1x128xf32> to vector<8x128xf32>
    %104 = arith.mulf %101, %103 : vector<8x128xf32>
    %c0_40 = arith.constant 0 : index
    %c0_41 = arith.constant 0 : index
    %105 = vector.load %arg9[%c0_40, %c0_41] : memref<72x128xf32, #tpu.memory_space<vmem>>, vector<8x128xf32>
    tpu.vector_store %arg9[%c0_40, %c0_41], %104 {strides = array<i32>} : memref<72x128xf32, #tpu.memory_space<vmem>>, vector<8x128xf32>,
    %c8_i32_42 = arith.constant 8 : i32
    %106 = tpu.dynamic_rotate %100 by %c8_i32_42 dim 1 : vector<8x128xf32>, i32 -> vector<8x128xf32>
    %107 = vector.extract_strided_slice %0 {offsets = [1, 0], sizes = [1, 128], strides = [1, 1]} : vector<8x128xf32> to vector<1x128xf32>
    %108 = vector.broadcast %107 : vector<1x128xf32> to vector<8x128xf32>
    %109 = arith.mulf %106, %108 : vector<8x128xf32>
    %c8_43 = arith.constant 8 : index
    %c0_44 = arith.constant 0 : index
    %110 = vector.load %arg9[%c8_43, %c0_44] : memref<72x128xf32, #tpu.memory_space<vmem>>, vector<8x128xf32>
    tpu.vector_store %arg9[%c8_43, %c0_44], %109 {strides = array<i32>} : memref<72x128xf32, #tpu.memory_space<vmem>>, vector<8x128xf32>,
    %c7_i32_45 = arith.constant 7 : i32
    %111 = tpu.dynamic_rotate %100 by %c7_i32_45 dim 1 : vector<8x128xf32>, i32 -> vector<8x128xf32>
    %112 = vector.extract_strided_slice %0 {offsets = [2, 0], sizes = [1, 128], strides = [1, 1]} : vector<8x128xf32> to vector<1x128xf32>
    %113 = vector.broadcast %112 : vector<1x128xf32> to vector<8x128xf32>
    %114 = arith.mulf %111, %113 : vector<8x128xf32>
    %c16_46 = arith.constant 16 : index
    %c0_47 = arith.constant 0 : index
    %115 = vector.load %arg9[%c16_46, %c0_47] : memref<72x128xf32, #tpu.memory_space<vmem>>, vector<8x128xf32>
    tpu.vector_store %arg9[%c16_46, %c0_47], %114 {strides = array<i32>} : memref<72x128xf32, #tpu.memory_space<vmem>>, vector<8x128xf32>,
    %c1_i32_48 = arith.constant 1 : i32
    %116 = tpu.dynamic_rotate %100 by %c1_i32_48 dim 1 : vector<8x128xf32>, i32 -> vector<8x128xf32>
    %117 = vector.extract_strided_slice %0 {offsets = [3, 0], sizes = [1, 128], strides = [1, 1]} : vector<8x128xf32> to vector<1x128xf32>
    %118 = vector.broadcast %117 : vector<1x128xf32> to vector<8x128xf32>
    %119 = arith.mulf %116, %118 : vector<8x128xf32>
    %c24_49 = arith.constant 24 : index
    %c0_50 = arith.constant 0 : index
    %120 = vector.load %arg9[%c24_49, %c0_50] : memref<72x128xf32, #tpu.memory_space<vmem>>, vector<8x128xf32>
    tpu.vector_store %arg9[%c24_49, %c0_50], %119 {strides = array<i32>} : memref<72x128xf32, #tpu.memory_space<vmem>>, vector<8x128xf32>,
    %c32_51 = arith.constant 32 : index
    %c0_52 = arith.constant 0 : index
    %121 = vector.load %arg9[%c32_51, %c0_52] : memref<72x128xf32, #tpu.memory_space<vmem>>, vector<8x128xf32>
    tpu.vector_store %arg9[%c32_51, %c0_52], %100 {strides = array<i32>} : memref<72x128xf32, #tpu.memory_space<vmem>>, vector<8x128xf32>,
    %c127_i32_53 = arith.constant 127 : i32
    %122 = tpu.dynamic_rotate %100 by %c127_i32_53 dim 1 : vector<8x128xf32>, i32 -> vector<8x128xf32>
    %123 = vector.extract_strided_slice %0 {offsets = [4, 0], sizes = [1, 128], strides = [1, 1]} : vector<8x128xf32> to vector<1x128xf32>
    %124 = vector.broadcast %123 : vector<1x128xf32> to vector<8x128xf32>
    %125 = arith.mulf %122, %124 : vector<8x128xf32>
    %c40_54 = arith.constant 40 : index
    %c0_55 = arith.constant 0 : index
    %126 = vector.load %arg9[%c40_54, %c0_55] : memref<72x128xf32, #tpu.memory_space<vmem>>, vector<8x128xf32>
    tpu.vector_store %arg9[%c40_54, %c0_55], %125 {strides = array<i32>} : memref<72x128xf32, #tpu.memory_space<vmem>>, vector<8x128xf32>,
    %c121_i32_56 = arith.constant 121 : i32
    %127 = tpu.dynamic_rotate %100 by %c121_i32_56 dim 1 : vector<8x128xf32>, i32 -> vector<8x128xf32>
    %128 = vector.extract_strided_slice %0 {offsets = [5, 0], sizes = [1, 128], strides = [1, 1]} : vector<8x128xf32> to vector<1x128xf32>
    %129 = vector.broadcast %128 : vector<1x128xf32> to vector<8x128xf32>
    %130 = arith.mulf %127, %129 : vector<8x128xf32>
    %c48_57 = arith.constant 48 : index
    %c0_58 = arith.constant 0 : index
    %131 = vector.load %arg9[%c48_57, %c0_58] : memref<72x128xf32, #tpu.memory_space<vmem>>, vector<8x128xf32>
    tpu.vector_store %arg9[%c48_57, %c0_58], %130 {strides = array<i32>} : memref<72x128xf32, #tpu.memory_space<vmem>>, vector<8x128xf32>,
    %c120_i32_59 = arith.constant 120 : i32
    %132 = tpu.dynamic_rotate %100 by %c120_i32_59 dim 1 : vector<8x128xf32>, i32 -> vector<8x128xf32>
    %133 = vector.extract_strided_slice %0 {offsets = [6, 0], sizes = [1, 128], strides = [1, 1]} : vector<8x128xf32> to vector<1x128xf32>
    %134 = vector.broadcast %133 : vector<1x128xf32> to vector<8x128xf32>
    %135 = arith.mulf %132, %134 : vector<8x128xf32>
    %c56_60 = arith.constant 56 : index
    %c0_61 = arith.constant 0 : index
    %136 = vector.load %arg9[%c56_60, %c0_61] : memref<72x128xf32, #tpu.memory_space<vmem>>, vector<8x128xf32>
    tpu.vector_store %arg9[%c56_60, %c0_61], %135 {strides = array<i32>} : memref<72x128xf32, #tpu.memory_space<vmem>>, vector<8x128xf32>,
    %c119_i32_62 = arith.constant 119 : i32
    %137 = tpu.dynamic_rotate %100 by %c119_i32_62 dim 1 : vector<8x128xf32>, i32 -> vector<8x128xf32>
    %138 = vector.extract_strided_slice %0 {offsets = [7, 0], sizes = [1, 128], strides = [1, 1]} : vector<8x128xf32> to vector<1x128xf32>
    %139 = vector.broadcast %138 : vector<1x128xf32> to vector<8x128xf32>
    %140 = arith.mulf %137, %139 : vector<8x128xf32>
    %c64_63 = arith.constant 64 : index
    %c0_64 = arith.constant 0 : index
    %141 = vector.load %arg9[%c64_63, %c0_64] : memref<72x128xf32, #tpu.memory_space<vmem>>, vector<8x128xf32>
    tpu.vector_store %arg9[%c64_63, %c0_64], %140 {strides = array<i32>} : memref<72x128xf32, #tpu.memory_space<vmem>>, vector<8x128xf32>,
    %c0_65 = arith.constant 0 : index
    %c0_66 = arith.constant 0 : index
    %142 = vector.load %arg7[%c0_65, %c0_66] : memref<8x72xbf16, #tpu.memory_space<vmem>>, vector<8x72xbf16>
    %c0_67 = arith.constant 0 : index
    %c0_68 = arith.constant 0 : index
    %143 = vector.load %arg9[%c0_67, %c0_68] : memref<72x128xf32, #tpu.memory_space<vmem>>, vector<72x128xf32>
    %144 = arith.truncf %143 : vector<72x128xf32> to vector<72x128xbf16>
    %cst_69 = arith.constant dense<0.000000e+00> : vector<8x128xf32>
    %145 = tpu.matmul %142, %144, %cst_69 {dimension_numbers = #tpu.dot_dimension_numbers<[1], [0], [0], [1], [0, 0, 1, 1], [], []>} : vector<8x72xbf16>, vector<72x128xbf16>, vector<8x128xf32> -> vector<8x128xf32>
    %146 = arith.addf %1, %145 : vector<8x128xf32>
    %c0_70 = arith.constant 0 : index
    %c0_71 = arith.constant 0 : index
    %147 = vector.load %arg8[%c0_70, %c0_71] : memref<8x128xf32, #tpu.memory_space<vmem>>, vector<8x128xf32>
    tpu.vector_store %arg8[%c0_70, %c0_71], %146 {strides = array<i32>} : memref<8x128xf32, #tpu.memory_space<vmem>>, vector<8x128xf32>,
    return
  }
}

module attributes {stable_mosaic.version = 11 : i64} {
  func.func @kernel(%arg0: memref<4x512xf32, #tpu.memory_space<vmem>>, %arg1: memref<8x512xf32, #tpu.memory_space<vmem>>, %arg2: memref<8x128xf32, #tpu.memory_space<vmem>>, %arg3: memref<4x1xf32, #tpu.memory_space<vmem>>, %arg4: memref<4x1xf32, #tpu.memory_space<vmem>>, %arg5: memref<16x36xbf16, #tpu.memory_space<vmem>>, %arg6: memref<8x1xf32, #tpu.memory_space<vmem>>, %arg7: memref<8x1xf32, #tpu.memory_space<vmem>>, %arg8: memref<8x72xbf16, #tpu.memory_space<vmem>>, %arg9: memref<512x128xf32, #tpu.memory_space<vmem>>, %arg10: memref<8x128xf32, #tpu.memory_space<vmem>>, %arg11: memref<36x512xf32, #tpu.memory_space<vmem>>, %arg12: memref<72x128xf32, #tpu.memory_space<vmem>>) attributes {dimension_semantics = [], scalar_prefetch = 0 : i64, scratch_operands = 2 : i64, tpu.core_type = #tpu.core_type<tc>} {
    %c0 = arith.constant 0 : index
    %c0_0 = arith.constant 0 : index
    %0 = vector.load %arg0[%c0, %c0_0] : memref<4x512xf32, #tpu.memory_space<vmem>>, vector<4x512xf32>
    %cst = arith.constant dense<0.000000e+00> : vector<4xf32>
    %1 = vector.multi_reduction <add>, %0, %cst [1] : vector<4x512xf32> to vector<4xf32>
    %2 = vector.shape_cast %1 : vector<4xf32> to vector<4x1xf32>
    %3 = arith.mulf %0, %0 : vector<4x512xf32>
    %cst_1 = arith.constant dense<0.000000e+00> : vector<4xf32>
    %4 = vector.multi_reduction <add>, %3, %cst_1 [1] : vector<4x512xf32> to vector<4xf32>
    %5 = vector.shape_cast %4 : vector<4xf32> to vector<4x1xf32>
    %cst_2 = arith.constant 0.001953125 : f32
    %6 = vector.broadcast %cst_2 : f32 to vector<4x1xf32>
    %7 = arith.mulf %2, %6 : vector<4x1xf32>
    %cst_3 = arith.constant 0.001953125 : f32
    %8 = vector.broadcast %cst_3 : f32 to vector<4x1xf32>
    %9 = arith.mulf %5, %8 : vector<4x1xf32>
    %10 = arith.mulf %7, %7 : vector<4x1xf32>
    %11 = arith.subf %9, %10 : vector<4x1xf32>
    %cst_4 = arith.constant 0.000000e+00 : f32
    %12 = vector.broadcast %cst_4 : f32 to vector<4x1xf32>
    %13 = arith.maximumf %11, %12 : vector<4x1xf32>
    %cst_5 = arith.constant 9.99999974E-6 : f32
    %14 = vector.broadcast %cst_5 : f32 to vector<4x1xf32>
    %15 = arith.addf %13, %14 : vector<4x1xf32>
    %16 = math.rsqrt %15 : vector<4x1xf32>
    %c0_6 = arith.constant 0 : index
    %c0_7 = arith.constant 0 : index
    %17 = vector.load %arg3[%c0_6, %c0_7] : memref<4x1xf32, #tpu.memory_space<vmem>>, vector<4x1xf32>
    %18 = arith.mulf %16, %17 : vector<4x1xf32>
    %19 = vector.broadcast %7 : vector<4x1xf32> to vector<4x512xf32>
    %20 = arith.subf %0, %19 : vector<4x512xf32>
    %21 = vector.broadcast %18 : vector<4x1xf32> to vector<4x512xf32>
    %22 = arith.mulf %20, %21 : vector<4x512xf32>
    %c0_8 = arith.constant 0 : index
    %c0_9 = arith.constant 0 : index
    %23 = vector.load %arg4[%c0_8, %c0_9] : memref<4x1xf32, #tpu.memory_space<vmem>>, vector<4x1xf32>
    %24 = vector.broadcast %23 : vector<4x1xf32> to vector<4x512xf32>
    %25 = arith.addf %22, %24 : vector<4x512xf32>
    %cst_10 = arith.constant 0.000000e+00 : f32
    %26 = vector.broadcast %cst_10 : f32 to vector<4x512xf32>
    %27 = arith.maximumf %25, %26 : vector<4x512xf32>
    %c0_11 = arith.constant 0 : index
    %c0_12 = arith.constant 0 : index
    %28 = vector.load %arg1[%c0_11, %c0_12] : memref<8x512xf32, #tpu.memory_space<vmem>>, vector<8x512xf32>
    %c17_i32 = arith.constant 17 : i32
    %29 = tpu.dynamic_rotate %27 by %c17_i32 dim 1 : vector<4x512xf32>, i32 -> vector<4x512xf32>
    %30 = vector.extract_strided_slice %28 {offsets = [0, 0], sizes = [1, 512], strides = [1, 1]} : vector<8x512xf32> to vector<1x512xf32>
    %31 = vector.broadcast %30 : vector<1x512xf32> to vector<4x512xf32>
    %32 = arith.mulf %29, %31 : vector<4x512xf32>
    %c0_13 = arith.constant 0 : index
    %c0_14 = arith.constant 0 : index
    %33 = vector.load %arg11[%c0_13, %c0_14] : memref<36x512xf32, #tpu.memory_space<vmem>>, vector<4x512xf32>
    tpu.vector_store %arg11[%c0_13, %c0_14], %32 {strides = array<i32>} : memref<36x512xf32, #tpu.memory_space<vmem>>, vector<4x512xf32>,
    %c16_i32 = arith.constant 16 : i32
    %34 = tpu.dynamic_rotate %27 by %c16_i32 dim 1 : vector<4x512xf32>, i32 -> vector<4x512xf32>
    %35 = vector.extract_strided_slice %28 {offsets = [1, 0], sizes = [1, 512], strides = [1, 1]} : vector<8x512xf32> to vector<1x512xf32>
    %36 = vector.broadcast %35 : vector<1x512xf32> to vector<4x512xf32>
    %37 = arith.mulf %34, %36 : vector<4x512xf32>
    %c4 = arith.constant 4 : index
    %c0_15 = arith.constant 0 : index
    %38 = vector.load %arg11[%c4, %c0_15] : memref<36x512xf32, #tpu.memory_space<vmem>>, vector<4x512xf32>
    tpu.vector_store %arg11[%c4, %c0_15], %37 {strides = array<i32>} : memref<36x512xf32, #tpu.memory_space<vmem>>, vector<4x512xf32>,
    %c15_i32 = arith.constant 15 : i32
    %39 = tpu.dynamic_rotate %27 by %c15_i32 dim 1 : vector<4x512xf32>, i32 -> vector<4x512xf32>
    %40 = vector.extract_strided_slice %28 {offsets = [2, 0], sizes = [1, 512], strides = [1, 1]} : vector<8x512xf32> to vector<1x512xf32>
    %41 = vector.broadcast %40 : vector<1x512xf32> to vector<4x512xf32>
    %42 = arith.mulf %39, %41 : vector<4x512xf32>
    %c8 = arith.constant 8 : index
    %c0_16 = arith.constant 0 : index
    %43 = vector.load %arg11[%c8, %c0_16] : memref<36x512xf32, #tpu.memory_space<vmem>>, vector<4x512xf32>
    tpu.vector_store %arg11[%c8, %c0_16], %42 {strides = array<i32>} : memref<36x512xf32, #tpu.memory_space<vmem>>, vector<4x512xf32>,
    %c1_i32 = arith.constant 1 : i32
    %44 = tpu.dynamic_rotate %27 by %c1_i32 dim 1 : vector<4x512xf32>, i32 -> vector<4x512xf32>
    %45 = vector.extract_strided_slice %28 {offsets = [3, 0], sizes = [1, 512], strides = [1, 1]} : vector<8x512xf32> to vector<1x512xf32>
    %46 = vector.broadcast %45 : vector<1x512xf32> to vector<4x512xf32>
    %47 = arith.mulf %44, %46 : vector<4x512xf32>
    %c12 = arith.constant 12 : index
    %c0_17 = arith.constant 0 : index
    %48 = vector.load %arg11[%c12, %c0_17] : memref<36x512xf32, #tpu.memory_space<vmem>>, vector<4x512xf32>
    tpu.vector_store %arg11[%c12, %c0_17], %47 {strides = array<i32>} : memref<36x512xf32, #tpu.memory_space<vmem>>, vector<4x512xf32>,
    %c16 = arith.constant 16 : index
    %c0_18 = arith.constant 0 : index
    %49 = vector.load %arg11[%c16, %c0_18] : memref<36x512xf32, #tpu.memory_space<vmem>>, vector<4x512xf32>
    tpu.vector_store %arg11[%c16, %c0_18], %27 {strides = array<i32>} : memref<36x512xf32, #tpu.memory_space<vmem>>, vector<4x512xf32>,
    %c511_i32 = arith.constant 511 : i32
    %50 = tpu.dynamic_rotate %27 by %c511_i32 dim 1 : vector<4x512xf32>, i32 -> vector<4x512xf32>
    %51 = vector.extract_strided_slice %28 {offsets = [4, 0], sizes = [1, 512], strides = [1, 1]} : vector<8x512xf32> to vector<1x512xf32>
    %52 = vector.broadcast %51 : vector<1x512xf32> to vector<4x512xf32>
    %53 = arith.mulf %50, %52 : vector<4x512xf32>
    %c20 = arith.constant 20 : index
    %c0_19 = arith.constant 0 : index
    %54 = vector.load %arg11[%c20, %c0_19] : memref<36x512xf32, #tpu.memory_space<vmem>>, vector<4x512xf32>
    tpu.vector_store %arg11[%c20, %c0_19], %53 {strides = array<i32>} : memref<36x512xf32, #tpu.memory_space<vmem>>, vector<4x512xf32>,
    %c497_i32 = arith.constant 497 : i32
    %55 = tpu.dynamic_rotate %27 by %c497_i32 dim 1 : vector<4x512xf32>, i32 -> vector<4x512xf32>
    %56 = vector.extract_strided_slice %28 {offsets = [5, 0], sizes = [1, 512], strides = [1, 1]} : vector<8x512xf32> to vector<1x512xf32>
    %57 = vector.broadcast %56 : vector<1x512xf32> to vector<4x512xf32>
    %58 = arith.mulf %55, %57 : vector<4x512xf32>
    %c24 = arith.constant 24 : index
    %c0_20 = arith.constant 0 : index
    %59 = vector.load %arg11[%c24, %c0_20] : memref<36x512xf32, #tpu.memory_space<vmem>>, vector<4x512xf32>
    tpu.vector_store %arg11[%c24, %c0_20], %58 {strides = array<i32>} : memref<36x512xf32, #tpu.memory_space<vmem>>, vector<4x512xf32>,
    %c496_i32 = arith.constant 496 : i32
    %60 = tpu.dynamic_rotate %27 by %c496_i32 dim 1 : vector<4x512xf32>, i32 -> vector<4x512xf32>
    %61 = vector.extract_strided_slice %28 {offsets = [6, 0], sizes = [1, 512], strides = [1, 1]} : vector<8x512xf32> to vector<1x512xf32>
    %62 = vector.broadcast %61 : vector<1x512xf32> to vector<4x512xf32>
    %63 = arith.mulf %60, %62 : vector<4x512xf32>
    %c28 = arith.constant 28 : index
    %c0_21 = arith.constant 0 : index
    %64 = vector.load %arg11[%c28, %c0_21] : memref<36x512xf32, #tpu.memory_space<vmem>>, vector<4x512xf32>
    tpu.vector_store %arg11[%c28, %c0_21], %63 {strides = array<i32>} : memref<36x512xf32, #tpu.memory_space<vmem>>, vector<4x512xf32>,
    %c495_i32 = arith.constant 495 : i32
    %65 = tpu.dynamic_rotate %27 by %c495_i32 dim 1 : vector<4x512xf32>, i32 -> vector<4x512xf32>
    %66 = vector.extract_strided_slice %28 {offsets = [7, 0], sizes = [1, 512], strides = [1, 1]} : vector<8x512xf32> to vector<1x512xf32>
    %67 = vector.broadcast %66 : vector<1x512xf32> to vector<4x512xf32>
    %68 = arith.mulf %65, %67 : vector<4x512xf32>
    %c32 = arith.constant 32 : index
    %c0_22 = arith.constant 0 : index
    %69 = vector.load %arg11[%c32, %c0_22] : memref<36x512xf32, #tpu.memory_space<vmem>>, vector<4x512xf32>
    tpu.vector_store %arg11[%c32, %c0_22], %68 {strides = array<i32>} : memref<36x512xf32, #tpu.memory_space<vmem>>, vector<4x512xf32>,
    %c0_23 = arith.constant 0 : index
    %c0_24 = arith.constant 0 : index
    %70 = vector.load %arg5[%c0_23, %c0_24] : memref<16x36xbf16, #tpu.memory_space<vmem>>, vector<16x36xbf16>
    %c0_25 = arith.constant 0 : index
    %c0_26 = arith.constant 0 : index
    %71 = vector.load %arg11[%c0_25, %c0_26] : memref<36x512xf32, #tpu.memory_space<vmem>>, vector<36x512xf32>
    %72 = arith.truncf %71 : vector<36x512xf32> to vector<36x512xbf16>
    %cst_27 = arith.constant dense<0.000000e+00> : vector<16x512xf32>
    %73 = tpu.matmul %70, %72, %cst_27 {dimension_numbers = #tpu.dot_dimension_numbers<[1], [0], [0], [1], [0, 0, 1, 1], [], []>} : vector<16x36xbf16>, vector<36x512xbf16>, vector<16x512xf32> -> vector<16x512xf32>
    %c0_28 = arith.constant 0 : index
    %c0_29 = arith.constant 0 : index
    %74 = vector.load %arg9[%c0_28, %c0_29] : memref<512x128xf32, #tpu.memory_space<vmem>>, vector<512x128xf32>
    %cst_30 = arith.constant dense<0.000000e+00> : vector<16x128xf32>
    %75 = tpu.matmul %73, %74, %cst_30 {dimension_numbers = #tpu.dot_dimension_numbers<[1], [0], [0], [1], [0, 0, 1, 1], [], []>} : vector<16x512xf32>, vector<512x128xf32>, vector<16x128xf32> -> vector<16x128xf32>
    %76 = vector.extract_strided_slice %75 {offsets = [0, 0], sizes = [8, 128], strides = [1, 1]} : vector<16x128xf32> to vector<8x128xf32>
    %77 = vector.extract_strided_slice %75 {offsets = [8, 0], sizes = [8, 128], strides = [1, 1]} : vector<16x128xf32> to vector<8x128xf32>
    %cst_31 = arith.constant dense<0.000000e+00> : vector<8xf32>
    %78 = vector.multi_reduction <add>, %76, %cst_31 [1] : vector<8x128xf32> to vector<8xf32>
    %79 = vector.shape_cast %78 : vector<8xf32> to vector<8x1xf32>
    %80 = arith.mulf %76, %76 : vector<8x128xf32>
    %cst_32 = arith.constant dense<0.000000e+00> : vector<8xf32>
    %81 = vector.multi_reduction <add>, %80, %cst_32 [1] : vector<8x128xf32> to vector<8xf32>
    %82 = vector.shape_cast %81 : vector<8xf32> to vector<8x1xf32>
    %cst_33 = arith.constant 7.812500e-03 : f32
    %83 = vector.broadcast %cst_33 : f32 to vector<8x1xf32>
    %84 = arith.mulf %79, %83 : vector<8x1xf32>
    %cst_34 = arith.constant 7.812500e-03 : f32
    %85 = vector.broadcast %cst_34 : f32 to vector<8x1xf32>
    %86 = arith.mulf %82, %85 : vector<8x1xf32>
    %87 = arith.mulf %84, %84 : vector<8x1xf32>
    %88 = arith.subf %86, %87 : vector<8x1xf32>
    %cst_35 = arith.constant 0.000000e+00 : f32
    %89 = vector.broadcast %cst_35 : f32 to vector<8x1xf32>
    %90 = arith.maximumf %88, %89 : vector<8x1xf32>
    %cst_36 = arith.constant 9.99999974E-6 : f32
    %91 = vector.broadcast %cst_36 : f32 to vector<8x1xf32>
    %92 = arith.addf %90, %91 : vector<8x1xf32>
    %93 = math.rsqrt %92 : vector<8x1xf32>
    %c0_37 = arith.constant 0 : index
    %c0_38 = arith.constant 0 : index
    %94 = vector.load %arg6[%c0_37, %c0_38] : memref<8x1xf32, #tpu.memory_space<vmem>>, vector<8x1xf32>
    %95 = arith.mulf %93, %94 : vector<8x1xf32>
    %96 = vector.broadcast %84 : vector<8x1xf32> to vector<8x128xf32>
    %97 = arith.subf %76, %96 : vector<8x128xf32>
    %98 = vector.broadcast %95 : vector<8x1xf32> to vector<8x128xf32>
    %99 = arith.mulf %97, %98 : vector<8x128xf32>
    %c0_39 = arith.constant 0 : index
    %c0_40 = arith.constant 0 : index
    %100 = vector.load %arg7[%c0_39, %c0_40] : memref<8x1xf32, #tpu.memory_space<vmem>>, vector<8x1xf32>
    %101 = vector.broadcast %100 : vector<8x1xf32> to vector<8x128xf32>
    %102 = arith.addf %99, %101 : vector<8x128xf32>
    %cst_41 = arith.constant 0.000000e+00 : f32
    %103 = vector.broadcast %cst_41 : f32 to vector<8x128xf32>
    %104 = arith.maximumf %102, %103 : vector<8x128xf32>
    %c0_42 = arith.constant 0 : index
    %c0_43 = arith.constant 0 : index
    %105 = vector.load %arg2[%c0_42, %c0_43] : memref<8x128xf32, #tpu.memory_space<vmem>>, vector<8x128xf32>
    %c9_i32 = arith.constant 9 : i32
    %106 = tpu.dynamic_rotate %104 by %c9_i32 dim 1 : vector<8x128xf32>, i32 -> vector<8x128xf32>
    %107 = vector.extract_strided_slice %105 {offsets = [0, 0], sizes = [1, 128], strides = [1, 1]} : vector<8x128xf32> to vector<1x128xf32>
    %108 = vector.broadcast %107 : vector<1x128xf32> to vector<8x128xf32>
    %109 = arith.mulf %106, %108 : vector<8x128xf32>
    %c0_44 = arith.constant 0 : index
    %c0_45 = arith.constant 0 : index
    %110 = vector.load %arg12[%c0_44, %c0_45] : memref<72x128xf32, #tpu.memory_space<vmem>>, vector<8x128xf32>
    tpu.vector_store %arg12[%c0_44, %c0_45], %109 {strides = array<i32>} : memref<72x128xf32, #tpu.memory_space<vmem>>, vector<8x128xf32>,
    %c8_i32 = arith.constant 8 : i32
    %111 = tpu.dynamic_rotate %104 by %c8_i32 dim 1 : vector<8x128xf32>, i32 -> vector<8x128xf32>
    %112 = vector.extract_strided_slice %105 {offsets = [1, 0], sizes = [1, 128], strides = [1, 1]} : vector<8x128xf32> to vector<1x128xf32>
    %113 = vector.broadcast %112 : vector<1x128xf32> to vector<8x128xf32>
    %114 = arith.mulf %111, %113 : vector<8x128xf32>
    %c8_46 = arith.constant 8 : index
    %c0_47 = arith.constant 0 : index
    %115 = vector.load %arg12[%c8_46, %c0_47] : memref<72x128xf32, #tpu.memory_space<vmem>>, vector<8x128xf32>
    tpu.vector_store %arg12[%c8_46, %c0_47], %114 {strides = array<i32>} : memref<72x128xf32, #tpu.memory_space<vmem>>, vector<8x128xf32>,
    %c7_i32 = arith.constant 7 : i32
    %116 = tpu.dynamic_rotate %104 by %c7_i32 dim 1 : vector<8x128xf32>, i32 -> vector<8x128xf32>
    %117 = vector.extract_strided_slice %105 {offsets = [2, 0], sizes = [1, 128], strides = [1, 1]} : vector<8x128xf32> to vector<1x128xf32>
    %118 = vector.broadcast %117 : vector<1x128xf32> to vector<8x128xf32>
    %119 = arith.mulf %116, %118 : vector<8x128xf32>
    %c16_48 = arith.constant 16 : index
    %c0_49 = arith.constant 0 : index
    %120 = vector.load %arg12[%c16_48, %c0_49] : memref<72x128xf32, #tpu.memory_space<vmem>>, vector<8x128xf32>
    tpu.vector_store %arg12[%c16_48, %c0_49], %119 {strides = array<i32>} : memref<72x128xf32, #tpu.memory_space<vmem>>, vector<8x128xf32>,
    %c1_i32_50 = arith.constant 1 : i32
    %121 = tpu.dynamic_rotate %104 by %c1_i32_50 dim 1 : vector<8x128xf32>, i32 -> vector<8x128xf32>
    %122 = vector.extract_strided_slice %105 {offsets = [3, 0], sizes = [1, 128], strides = [1, 1]} : vector<8x128xf32> to vector<1x128xf32>
    %123 = vector.broadcast %122 : vector<1x128xf32> to vector<8x128xf32>
    %124 = arith.mulf %121, %123 : vector<8x128xf32>
    %c24_51 = arith.constant 24 : index
    %c0_52 = arith.constant 0 : index
    %125 = vector.load %arg12[%c24_51, %c0_52] : memref<72x128xf32, #tpu.memory_space<vmem>>, vector<8x128xf32>
    tpu.vector_store %arg12[%c24_51, %c0_52], %124 {strides = array<i32>} : memref<72x128xf32, #tpu.memory_space<vmem>>, vector<8x128xf32>,
    %c32_53 = arith.constant 32 : index
    %c0_54 = arith.constant 0 : index
    %126 = vector.load %arg12[%c32_53, %c0_54] : memref<72x128xf32, #tpu.memory_space<vmem>>, vector<8x128xf32>
    tpu.vector_store %arg12[%c32_53, %c0_54], %104 {strides = array<i32>} : memref<72x128xf32, #tpu.memory_space<vmem>>, vector<8x128xf32>,
    %c127_i32 = arith.constant 127 : i32
    %127 = tpu.dynamic_rotate %104 by %c127_i32 dim 1 : vector<8x128xf32>, i32 -> vector<8x128xf32>
    %128 = vector.extract_strided_slice %105 {offsets = [4, 0], sizes = [1, 128], strides = [1, 1]} : vector<8x128xf32> to vector<1x128xf32>
    %129 = vector.broadcast %128 : vector<1x128xf32> to vector<8x128xf32>
    %130 = arith.mulf %127, %129 : vector<8x128xf32>
    %c40 = arith.constant 40 : index
    %c0_55 = arith.constant 0 : index
    %131 = vector.load %arg12[%c40, %c0_55] : memref<72x128xf32, #tpu.memory_space<vmem>>, vector<8x128xf32>
    tpu.vector_store %arg12[%c40, %c0_55], %130 {strides = array<i32>} : memref<72x128xf32, #tpu.memory_space<vmem>>, vector<8x128xf32>,
    %c121_i32 = arith.constant 121 : i32
    %132 = tpu.dynamic_rotate %104 by %c121_i32 dim 1 : vector<8x128xf32>, i32 -> vector<8x128xf32>
    %133 = vector.extract_strided_slice %105 {offsets = [5, 0], sizes = [1, 128], strides = [1, 1]} : vector<8x128xf32> to vector<1x128xf32>
    %134 = vector.broadcast %133 : vector<1x128xf32> to vector<8x128xf32>
    %135 = arith.mulf %132, %134 : vector<8x128xf32>
    %c48 = arith.constant 48 : index
    %c0_56 = arith.constant 0 : index
    %136 = vector.load %arg12[%c48, %c0_56] : memref<72x128xf32, #tpu.memory_space<vmem>>, vector<8x128xf32>
    tpu.vector_store %arg12[%c48, %c0_56], %135 {strides = array<i32>} : memref<72x128xf32, #tpu.memory_space<vmem>>, vector<8x128xf32>,
    %c120_i32 = arith.constant 120 : i32
    %137 = tpu.dynamic_rotate %104 by %c120_i32 dim 1 : vector<8x128xf32>, i32 -> vector<8x128xf32>
    %138 = vector.extract_strided_slice %105 {offsets = [6, 0], sizes = [1, 128], strides = [1, 1]} : vector<8x128xf32> to vector<1x128xf32>
    %139 = vector.broadcast %138 : vector<1x128xf32> to vector<8x128xf32>
    %140 = arith.mulf %137, %139 : vector<8x128xf32>
    %c56 = arith.constant 56 : index
    %c0_57 = arith.constant 0 : index
    %141 = vector.load %arg12[%c56, %c0_57] : memref<72x128xf32, #tpu.memory_space<vmem>>, vector<8x128xf32>
    tpu.vector_store %arg12[%c56, %c0_57], %140 {strides = array<i32>} : memref<72x128xf32, #tpu.memory_space<vmem>>, vector<8x128xf32>,
    %c119_i32 = arith.constant 119 : i32
    %142 = tpu.dynamic_rotate %104 by %c119_i32 dim 1 : vector<8x128xf32>, i32 -> vector<8x128xf32>
    %143 = vector.extract_strided_slice %105 {offsets = [7, 0], sizes = [1, 128], strides = [1, 1]} : vector<8x128xf32> to vector<1x128xf32>
    %144 = vector.broadcast %143 : vector<1x128xf32> to vector<8x128xf32>
    %145 = arith.mulf %142, %144 : vector<8x128xf32>
    %c64 = arith.constant 64 : index
    %c0_58 = arith.constant 0 : index
    %146 = vector.load %arg12[%c64, %c0_58] : memref<72x128xf32, #tpu.memory_space<vmem>>, vector<8x128xf32>
    tpu.vector_store %arg12[%c64, %c0_58], %145 {strides = array<i32>} : memref<72x128xf32, #tpu.memory_space<vmem>>, vector<8x128xf32>,
    %c0_59 = arith.constant 0 : index
    %c0_60 = arith.constant 0 : index
    %147 = vector.load %arg8[%c0_59, %c0_60] : memref<8x72xbf16, #tpu.memory_space<vmem>>, vector<8x72xbf16>
    %c0_61 = arith.constant 0 : index
    %c0_62 = arith.constant 0 : index
    %148 = vector.load %arg12[%c0_61, %c0_62] : memref<72x128xf32, #tpu.memory_space<vmem>>, vector<72x128xf32>
    %149 = arith.truncf %148 : vector<72x128xf32> to vector<72x128xbf16>
    %cst_63 = arith.constant dense<0.000000e+00> : vector<8x128xf32>
    %150 = tpu.matmul %147, %149, %cst_63 {dimension_numbers = #tpu.dot_dimension_numbers<[1], [0], [0], [1], [0, 0, 1, 1], [], []>} : vector<8x72xbf16>, vector<72x128xbf16>, vector<8x128xf32> -> vector<8x128xf32>
    %151 = arith.addf %77, %150 : vector<8x128xf32>
    %c0_64 = arith.constant 0 : index
    %c0_65 = arith.constant 0 : index
    %152 = vector.load %arg10[%c0_64, %c0_65] : memref<8x128xf32, #tpu.memory_space<vmem>>, vector<8x128xf32>
    tpu.vector_store %arg10[%c0_64, %c0_65], %151 {strides = array<i32>} : memref<8x128xf32, #tpu.memory_space<vmem>>, vector<8x128xf32>,
    return
  }
}

</mosaic_0001>

<llo_original>
// kernel: network_block_forward.3
$region0: #{network_block_forward.3}
  #allocation0 [shape = 'u32[]', space=smem, size = 0x4, offset = 0x4, fixed_abs, tag = 'smem constant byte address 0x4 - core index']
  #allocation1 [shape = 'u32[144,128]{1,0:T(1,128)}', space=vmem, size = 0x12000, scoped, tag = 'internal scratch']
  #allocation2 [shape = 'f32[72,128]{1,0:T(8,128)}', space=vmem, size = 0x9000, scoped, tag = 'scratch operand']
  %s0 = inlined_call_operand.vmem [shape: f32[8,128], index: 0, kind: input, shape index: {}, may-alias: {0,8}]
  %s1 = inlined_call_operand.vmem [shape: f32[8,128], index: 1, kind: input, shape index: {}]
  %s2 = inlined_call_operand.vmem [shape: f32[8,1], index: 2, kind: input, shape index: {}]
  %s3 = inlined_call_operand.vmem [shape: f32[8,1], index: 3, kind: input, shape index: {}]
  %s4 = inlined_call_operand.vmem [shape: bf16[8,72], index: 4, kind: input, shape index: {}]
  %s5 = inlined_call_operand.vmem [shape: f32[8,1], index: 5, kind: input, shape index: {}]
  %s6 = inlined_call_operand.vmem [shape: f32[8,1], index: 6, kind: input, shape index: {}]
  %s7 = inlined_call_operand.vmem [shape: bf16[8,72], index: 7, kind: input, shape index: {}]
  %s8 = inlined_call_operand.vmem [shape: f32[8,128], index: 8, kind: output, shape index: {}, may-alias: {0,8}]
  %s9 = sld [smem:[#allocation0]]
  $region42: #{network_block_forward.3} parent=0
    _
  %s11 = ssub.s32 1, %s9
  %s12 = scalar_select 0, %s11, %s9
  // Predicated region
  $region2: #{network_block_forward.3} parent=0 // pred_check
    _
  $region3: #{network_block_forward.3} parent=0 // pred_check_branch
    %14 = sbr.rel (0) target = $region5
  $region4: #{network_block_forward.3} parent=0 // pred_region
    _
  $region5: #{network_block_forward.3} parent=0 // pred_fallthru
    _
  // Predicated region
  $region6: #{network_block_forward.3} parent=0 // pred_check
    _
  $region7: #{network_block_forward.3} parent=0 // pred_check_branch
    %16 = sbr.rel (0) target = $region9
  $region8: #{network_block_forward.3} parent=0 // pred_region
    _
  $region9: #{network_block_forward.3} parent=0 // pred_fallthru
    _
  // Predicated region
  $region10: #{network_block_forward.3} parent=0 // pred_check
    _
  $region11: #{network_block_forward.3} parent=0 // pred_check_branch
    %18 = sbr.rel (0) target = $region13
  $region12: #{network_block_forward.3} parent=0 // pred_region
    _
  $region13: #{network_block_forward.3} parent=0 // pred_fallthru
    _
  // Predicated region
  $region14: #{network_block_forward.3} parent=0 // pred_check
    _
  $region15: #{network_block_forward.3} parent=0 // pred_check_branch
    %20 = sbr.rel (0) target = $region17
  $region16: #{network_block_forward.3} parent=0 // pred_region
    _
  $region17: #{network_block_forward.3} parent=0 // pred_fallthru
    _
  // Predicated region
  $region18: #{network_block_forward.3} parent=0 // pred_check
    _
  $region19: #{network_block_forward.3} parent=0 // pred_check_branch
    %22 = sbr.rel (0) target = $region21
  $region20: #{network_block_forward.3} parent=0 // pred_region
    _
  $region21: #{network_block_forward.3} parent=0 // pred_fallthru
    _
  // Predicated region
  $region22: #{network_block_forward.3} parent=0 // pred_check
    _
  $region23: #{network_block_forward.3} parent=0 // pred_check_branch
    %24 = sbr.rel (0) target = $region25
  $region24: #{network_block_forward.3} parent=0 // pred_region
    _
  $region25: #{network_block_forward.3} parent=0 // pred_fallthru
    _
  // Predicated region
  $region26: #{network_block_forward.3} parent=0 // pred_check
    _
  $region27: #{network_block_forward.3} parent=0 // pred_check_branch
    %26 = sbr.rel (0) target = $region29
  $region28: #{network_block_forward.3} parent=0 // pred_region
    _
  $region29: #{network_block_forward.3} parent=0 // pred_fallthru
    _
  // Predicated region
  $region30: #{network_block_forward.3} parent=0 // pred_check
    _
  $region31: #{network_block_forward.3} parent=0 // pred_check_branch
    %28 = sbr.rel (0) target = $region33
  $region32: #{network_block_forward.3} parent=0 // pred_region
    _
  $region33: #{network_block_forward.3} parent=0 // pred_fallthru
    _
  %v30 = vld [vmem:[%s1] sm:$0xff]
  %v31 = vld [vmem:[%s0] sm:$0xff]
  %32 = vadd.xlane.f32.xlu0 %v31
  %v33 = vpop.xlane.xlu0 %32
  %v34 = vmul.f32 %v31, %v31
  %35 = vadd.xlane.f32.xlu0 %v34
  %v36 = vpop.xlane.xlu0 %35
  %v37 = vmul.f32 %v33, 0.0078125
  %v38 = vmul.f32 %v36, 0.0078125
  %v39 = vmul.f32 %v37, %v37
  %v40 = vsub.f32 %v38, %v39
  %v41 = vmax.f32 %v40, 0.0
  %v42 = vadd.f32 %v41, 1e-05
  %v43 = vrsqrt.pop %v42
  %v44 = vld [vmem:[%s2] sm:$0xff]
  %v45 = vmul.f32 %v43, %v44
  %v46 = vsub.f32 %v31, %v37
  %48 = vset.pattern.permute.xlu0 0
  %49 = vperm.xlu0 %48, %v45
  %v50 = vpop.permute.xlu0 %49
  %v52 = vmul.f32 %v46, %v50
  %v53 = vld [vmem:[%s3] sm:$0xff]
  %55 = vset.pattern.permute.xlu0 0
  %56 = vperm.xlu0 %55, %v53
  %v57 = vpop.permute.xlu0 %56
  %v59 = vadd.f32 %v52, %v57
  %v60 = vmax.f32 %v59, 0.0
  %61 = vrot.lane.b32.xlu0 %v60, 9
  %v62 = vpop.permute.xlu0 %61
  %v63 = vlaneseq
  %v64 = vshrl.u32 %v63, 7
  %v65 = vsub.s32 0, %v64
  %v66 = vrot.slane %v30, %v65
  %v67 = vmul.f32 %v62, %v66
  %68 = vst [vmem:[#allocation2] sm:$0xff] %v67
  %69 = vrot.lane.b32.xlu0 %v60, 8
  %v70 = vpop.permute.xlu0 %69
  %v71 = vlaneseq
  %v72 = vshrl.u32 %v71, 7
  %v73 = vsub.s32 1, %v72
  %v74 = vrot.slane %v30, %v73
  %v75 = vmul.f32 %v70, %v74
  %76 = vst [vmem:[#allocation2 + $0x8] sm:$0xff] %v75
  %77 = vrot.lane.b32.xlu0 %v60, 7
  %v78 = vpop.permute.xlu0 %77
  %v79 = vlaneseq
  %v80 = vshrl.u32 %v79, 7
  %v81 = vsub.s32 2, %v80
  %v82 = vrot.slane %v30, %v81
  %v83 = vmul.f32 %v78, %v82
  %84 = vst [vmem:[#allocation2 + $0x10] sm:$0xff] %v83
  %85 = vrot.lane.b32.xlu0 %v60, 1
  %v86 = vpop.permute.xlu0 %85
  %v87 = vlaneseq
  %v88 = vshrl.u32 %v87, 7
  %v89 = vsub.s32 3, %v88
  %v90 = vrot.slane %v30, %v89
  %v91 = vmul.f32 %v86, %v90
  %92 = vst [vmem:[#allocation2 + $0x18] sm:$0xff] %v91
  %93 = vst [vmem:[#allocation2 + $0x20] sm:$0xff] %v60
  %94 = vrot.lane.b32.xlu0 %v60, 127
  %v95 = vpop.permute.xlu0 %94
  %v96 = vlaneseq
  %v97 = vshrl.u32 %v96, 7
  %v98 = vsub.s32 4, %v97
  %v99 = vrot.slane %v30, %v98
  %v100 = vmul.f32 %v95, %v99
  %101 = vst [vmem:[#allocation2 + $0x28] sm:$0xff] %v100
  %102 = vrot.lane.b32.xlu0 %v60, 121
  %v103 = vpop.permute.xlu0 %102
  %v104 = vlaneseq
  %v105 = vshrl.u32 %v104, 7
  %v106 = vsub.s32 5, %v105
  %v107 = vrot.slane %v30, %v106
  %v108 = vmul.f32 %v103, %v107
  %109 = vst [vmem:[#allocation2 + $0x30] sm:$0xff] %v108
  %110 = vrot.lane.b32.xlu0 %v60, 120
  %v111 = vpop.permute.xlu0 %110
  %v112 = vlaneseq
  %v113 = vshrl.u32 %v112, 7
  %v114 = vsub.s32 6, %v113
  %v115 = vrot.slane %v30, %v114
  %v116 = vmul.f32 %v111, %v115
  %117 = vst [vmem:[#allocation2 + $0x38] sm:$0xff] %v116
  %118 = vrot.lane.b32.xlu0 %v60, 119
  %v119 = vpop.permute.xlu0 %118
  %v120 = vlaneseq
  %v121 = vshrl.u32 %v120, 7
  %v122 = vsub.s32 7, %v121
  %v123 = vrot.slane %v30, %v122
  %v124 = vmul.f32 %v119, %v123
  %125 = vst [vmem:[#allocation2 + $0x40] sm:$0xff] %v124
  %v126 = vld [vmem:[%s4] sm:$0xf]
  %v127 = vld [vmem:[#allocation2] sm:$0xff]
  %v128 = vld [vmem:[#allocation2 + $0x8] sm:$0xff]
  %v129 = vld [vmem:[#allocation2 + $0x10] sm:$0xff]
  %v130 = vld [vmem:[#allocation2 + $0x18] sm:$0xff]
  %v131 = vld [vmem:[#allocation2 + $0x20] sm:$0xff]
  %v132 = vld [vmem:[#allocation2 + $0x28] sm:$0xff]
  %v133 = vld [vmem:[#allocation2 + $0x30] sm:$0xff]
  %v134 = vld [vmem:[#allocation2 + $0x38] sm:$0xff]
  %v135 = vld [vmem:[#allocation2 + $0x40] sm:$0xff]
  %v136 = vpack.c.bf16 %v128, %v127
  %v137 = vpack.c.bf16 %v130, %v129
  %v138 = vpack.c.bf16 %v132, %v131
  %v139 = vpack.c.bf16 %v134, %v133
  %v140 = vpack.c.bf16 %v135, %v135
  %vm141 = vcmask 588800
  %v143 = vsel %vm141, %v126, 0
  %vm145 = vcmask 1043456
  %v147 = vsel %vm145, %v140, 0
  %149 = vmatprep.subr.bf16.mxu0 0
  %150 = vmatpush1.bf16.msra.mxu0 %v136
  %151 = vmatprep.subr.bf16.mxu0 0
  %152 = vmatpush1.bf16.msra.mxu0 %v137
  %153 = vmatprep.subr.bf16.mxu0 0
  %154 = vmatpush1.bf16.msra.mxu0 %v138
  %155 = vmatprep.subr.bf16.mxu0 0
  %156 = vmatpush1.bf16.msra.mxu0 %v139
  %157 = vmatprep.subr.bf16.mxu0 0
  %158 = vmatpush1.bf16.msra.mxu0 %v147
  %159 = vmatprep.subr.bf16.mxu0 0
  %160 = vmatpush1.bf16.msra.mxu0 0
  %161 = vmatprep.subr.bf16.mxu0 0
  %162 = vmatpush1.bf16.msra.mxu0 0
  %163 = vmatprep.subr.bf16.mxu0 0
  %164 = vmatpush1.bf16.msra.mxu0 0
  %165 = vmatprep.subr.bf16.mxu0 0
  %166 = vmatpush1.bf16.msra.mxu0 0
  %167 = vmatprep.subr.bf16.mxu0 0
  %168 = vmatpush1.bf16.msra.mxu0 0
  %169 = vmatprep.subr.bf16.mxu0 0
  %170 = vmatpush1.bf16.msra.mxu0 0
  %171 = vmatprep.subr.bf16.mxu0 0
  %172 = vmatpush1.bf16.msra.mxu0 0
  %173 = vmatprep.subr.bf16.mxu0 0
  %174 = vmatpush1.bf16.msra.mxu0 0
  %175 = vmatprep.subr.bf16.mxu0 0
  %176 = vmatpush1.bf16.msra.mxu0 0
  %177 = vmatprep.subr.bf16.mxu0 0
  %178 = vmatpush1.bf16.msra.mxu0 0
  %179 = vmatprep.subr.bf16.mxu0 0
  %180 = vmatpush1.bf16.msra.mxu0 0
  %181 = vmatprep.mubr.bf16.mxu0 0
  %182 = vmatmul.mubr.bf16.gmra.mrb[0].mxu0 %v143
  %v183 = vpop.f32.mrb[0].mxu0
  %v184 = vadd.f32 0.0, %v183
  %v185 = vpop.f32.mrb[0].mxu0
  %v186 = vpop.f32.mrb[0].mxu0
  %v187 = vpop.f32.mrb[0].mxu0
  %188 = vdwg.mxu0
  %189 = vadd.xlane.f32.xlu0 %v184
  %v190 = vpop.xlane.xlu0 %189
  %v191 = vmul.f32 %v184, %v184
  %192 = vadd.xlane.f32.xlu0 %v191
  %v193 = vpop.xlane.xlu0 %192
  %v194 = vmul.f32 %v190, 0.0078125
  %v195 = vmul.f32 %v193, 0.0078125
  %v196 = vmul.f32 %v194, %v194
  %v197 = vsub.f32 %v195, %v196
  %v198 = vmax.f32 %v197, 0.0
  %v199 = vadd.f32 %v198, 1e-05
  %v200 = vrsqrt.pop %v199
  %v201 = vld [vmem:[%s5] sm:$0xff]
  %v202 = vmul.f32 %v200, %v201
  %v203 = vsub.f32 %v184, %v194
  %205 = vset.pattern.permute.xlu0 0
  %206 = vperm.xlu0 %205, %v202
  %v207 = vpop.permute.xlu0 %206
  %v209 = vmul.f32 %v203, %v207
  %v210 = vld [vmem:[%s6] sm:$0xff]
  %212 = vset.pattern.permute.xlu0 0
  %213 = vperm.xlu0 %212, %v210
  %v214 = vpop.permute.xlu0 %213
  %v216 = vadd.f32 %v209, %v214
  %v217 = vmax.f32 %v216, 0.0
  %218 = vrot.lane.b32.xlu0 %v217, 9
  %v219 = vpop.permute.xlu0 %218
  %v220 = vmul.f32 %v219, %v66
  %221 = vst [vmem:[#allocation2] sm:$0xff] %v220
  %222 = vrot.lane.b32.xlu0 %v217, 8
  %v223 = vpop.permute.xlu0 %222
  %v224 = vmul.f32 %v223, %v74
  %225 = vst [vmem:[#allocation2 + $0x8] sm:$0xff] %v224
  %226 = vrot.lane.b32.xlu0 %v217, 7
  %v227 = vpop.permute.xlu0 %226
  %v228 = vmul.f32 %v227, %v82
  %229 = vst [vmem:[#allocation2 + $0x10] sm:$0xff] %v228
  %230 = vrot.lane.b32.xlu0 %v217, 1
  %v231 = vpop.permute.xlu0 %230
  %v232 = vmul.f32 %v231, %v90
  %233 = vst [vmem:[#allocation2 + $0x18] sm:$0xff] %v232
  %234 = vst [vmem:[#allocation2 + $0x20] sm:$0xff] %v217
  %235 = vrot.lane.b32.xlu0 %v217, 127
  %v236 = vpop.permute.xlu0 %235
  %v237 = vmul.f32 %v236, %v99
  %238 = vst [vmem:[#allocation2 + $0x28] sm:$0xff] %v237
  %239 = vrot.lane.b32.xlu0 %v217, 121
  %v240 = vpop.permute.xlu0 %239
  %v241 = vmul.f32 %v240, %v107
  %242 = vst [vmem:[#allocation2 + $0x30] sm:$0xff] %v241
  %243 = vrot.lane.b32.xlu0 %v217, 120
  %v244 = vpop.permute.xlu0 %243
  %v245 = vmul.f32 %v244, %v115
  %246 = vst [vmem:[#allocation2 + $0x38] sm:$0xff] %v245
  %247 = vrot.lane.b32.xlu0 %v217, 119
  %v248 = vpop.permute.xlu0 %247
  %v249 = vmul.f32 %v248, %v123
  %250 = vst [vmem:[#allocation2 + $0x40] sm:$0xff] %v249
  %v251 = vld [vmem:[%s7] sm:$0xf]
  %v252 = vld [vmem:[#allocation2] sm:$0xff]
  %v253 = vld [vmem:[#allocation2 + $0x8] sm:$0xff]
  %v254 = vld [vmem:[#allocation2 + $0x10] sm:$0xff]
  %v255 = vld [vmem:[#allocation2 + $0x18] sm:$0xff]
  %v256 = vld [vmem:[#allocation2 + $0x20] sm:$0xff]
  %v257 = vld [vmem:[#allocation2 + $0x28] sm:$0xff]
  %v258 = vld [vmem:[#allocation2 + $0x30] sm:$0xff]
  %v259 = vld [vmem:[#allocation2 + $0x38] sm:$0xff]
  %v260 = vld [vmem:[#allocation2 + $0x40] sm:$0xff]
  %v261 = vpack.c.bf16 %v253, %v252
  %v262 = vpack.c.bf16 %v255, %v254
  %v263 = vpack.c.bf16 %v257, %v256
  %v264 = vpack.c.bf16 %v259, %v258
  %v265 = vpack.c.bf16 %v260, %v260
  %v267 = vsel %vm141, %v251, 0
  %v270 = vsel %vm145, %v265, 0
  %272 = vmatprep.subr.bf16.mxu0 0
  %273 = vmatpush1.bf16.msra.mxu0 %v261
  %274 = vmatprep.subr.bf16.mxu0 0
  %275 = vmatpush1.bf16.msra.mxu0 %v262
  %276 = vmatprep.subr.bf16.mxu0 0
  %277 = vmatpush1.bf16.msra.mxu0 %v263
  %278 = vmatprep.subr.bf16.mxu0 0
  %279 = vmatpush1.bf16.msra.mxu0 %v264
  %280 = vmatprep.subr.bf16.mxu0 0
  %281 = vmatpush1.bf16.msra.mxu0 %v270
  %282 = vmatprep.subr.bf16.mxu0 0
  %283 = vmatpush1.bf16.msra.mxu0 0
  %284 = vmatprep.subr.bf16.mxu0 0
  %285 = vmatpush1.bf16.msra.mxu0 0
  %286 = vmatprep.subr.bf16.mxu0 0
  %287 = vmatpush1.bf16.msra.mxu0 0
  %288 = vmatprep.subr.bf16.mxu0 0
  %289 = vmatpush1.bf16.msra.mxu0 0
  %290 = vmatprep.subr.bf16.mxu0 0
  %291 = vmatpush1.bf16.msra.mxu0 0
  %292 = vmatprep.subr.bf16.mxu0 0
  %293 = vmatpush1.bf16.msra.mxu0 0
  %294 = vmatprep.subr.bf16.mxu0 0
  %295 = vmatpush1.bf16.msra.mxu0 0
  %296 = vmatprep.subr.bf16.mxu0 0
  %297 = vmatpush1.bf16.msra.mxu0 0
  %298 = vmatprep.subr.bf16.mxu0 0
  %299 = vmatpush1.bf16.msra.mxu0 0
  %300 = vmatprep.subr.bf16.mxu0 0
  %301 = vmatpush1.bf16.msra.mxu0 0
  %302 = vmatprep.subr.bf16.mxu0 0
  %303 = vmatpush1.bf16.msra.mxu0 0
  %304 = vmatprep.mubr.bf16.mxu0 0
  %305 = vmatmul.mubr.bf16.gmra.mrb[0].mxu0 %v267
  %v306 = vpop.f32.mrb[0].mxu0
  %v307 = vadd.f32 0.0, %v306
  %v308 = vpop.f32.mrb[0].mxu0
  %v309 = vpop.f32.mrb[0].mxu0
  %v310 = vpop.f32.mrb[0].mxu0
  %311 = vdwg.mxu0
  %v312 = vadd.f32 %v31, %v307
  %313 = vst [vmem:[%s8] sm:$0xff] %v312
  // Predicated region
  $region34: #{network_block_forward.3} parent=0 // pred_check
    _
  $region35: #{network_block_forward.3} parent=0 // pred_check_branch
    %315 = sbr.rel (0) target = $region37
  $region36: #{network_block_forward.3} parent=0 // pred_region
    _
  $region37: #{network_block_forward.3} parent=0 // pred_fallthru
    _
  // Predicated region
  $region38: #{network_block_forward.3} parent=0 // pred_check
    _
  $region39: #{network_block_forward.3} parent=0 // pred_check_branch
    %317 = sbr.rel (0) target = $region41
  $region40: #{network_block_forward.3} parent=0 // pred_region
    _
  $region41: #{network_block_forward.3} parent=0 // pred_fallthru
    _

// kernel: network_block_forward.2
$region0: #{network_block_forward.2}
  #allocation0 [shape = 'u32[]', space=smem, size = 0x4, offset = 0x4, fixed_abs, tag = 'smem constant byte address 0x4 - core index']
  #allocation1 [shape = 'u32[144,128]{1,0:T(1,128)}', space=vmem, size = 0x12000, scoped, tag = 'internal scratch']
  #allocation2 [shape = 'f32[36,512]{1,0:T(8,128)}', space=vmem, size = 0x14000, scoped, tag = 'scratch operand']
  #allocation3 [shape = 'f32[72,128]{1,0:T(8,128)}', space=vmem, size = 0x9000, scoped, tag = 'scratch operand']
  %s0 = inlined_call_operand.vmem [shape: f32[4,512], index: 0, kind: input, shape index: {}]
  %s1 = inlined_call_operand.vmem [shape: f32[8,512], index: 1, kind: input, shape index: {}]
  %s2 = inlined_call_operand.vmem [shape: f32[8,128], index: 2, kind: input, shape index: {}]
  %s3 = inlined_call_operand.vmem [shape: f32[4,1], index: 3, kind: input, shape index: {}]
  %s4 = inlined_call_operand.vmem [shape: f32[4,1], index: 4, kind: input, shape index: {}]
  %s5 = inlined_call_operand.vmem [shape: bf16[16,36], index: 5, kind: input, shape index: {}]
  %s6 = inlined_call_operand.vmem [shape: f32[8,1], index: 6, kind: input, shape index: {}]
  %s7 = inlined_call_operand.vmem [shape: f32[8,1], index: 7, kind: input, shape index: {}]
  %s8 = inlined_call_operand.vmem [shape: bf16[8,72], index: 8, kind: input, shape index: {}]
  %s9 = inlined_call_operand.vmem [shape: f32[512,128], index: 9, kind: input, shape index: {}]
  %s10 = inlined_call_operand.vmem [shape: f32[8,128], index: 10, kind: output, shape index: {}]
  %s11 = sld [smem:[#allocation0]]
  $region50: #{network_block_forward.2} parent=0
    _
  %s13 = ssub.s32 1, %s11
  %s14 = scalar_select 0, %s13, %s11
  // Predicated region
  $region2: #{network_block_forward.2} parent=0 // pred_check
    _
  $region3: #{network_block_forward.2} parent=0 // pred_check_branch
    %16 = sbr.rel (0) target = $region5
  $region4: #{network_block_forward.2} parent=0 // pred_region
    _
  $region5: #{network_block_forward.2} parent=0 // pred_fallthru
    _
  // Predicated region
  $region6: #{network_block_forward.2} parent=0 // pred_check
    _
  $region7: #{network_block_forward.2} parent=0 // pred_check_branch
    %18 = sbr.rel (0) target = $region9
  $region8: #{network_block_forward.2} parent=0 // pred_region
    _
  $region9: #{network_block_forward.2} parent=0 // pred_fallthru
    _
  // Predicated region
  $region10: #{network_block_forward.2} parent=0 // pred_check
    _
  $region11: #{network_block_forward.2} parent=0 // pred_check_branch
    %20 = sbr.rel (0) target = $region13
  $region12: #{network_block_forward.2} parent=0 // pred_region
    _
  $region13: #{network_block_forward.2} parent=0 // pred_fallthru
    _
  // Predicated region
  $region14: #{network_block_forward.2} parent=0 // pred_check
    _
  $region15: #{network_block_forward.2} parent=0 // pred_check_branch
    %22 = sbr.rel (0) target = $region17
  $region16: #{network_block_forward.2} parent=0 // pred_region
    _
  $region17: #{network_block_forward.2} parent=0 // pred_fallthru
    _
  // Predicated region
  $region18: #{network_block_forward.2} parent=0 // pred_check
    _
  $region19: #{network_block_forward.2} parent=0 // pred_check_branch
    %24 = sbr.rel (0) target = $region21
  $region20: #{network_block_forward.2} parent=0 // pred_region
    _
  $region21: #{network_block_forward.2} parent=0 // pred_fallthru
    _
  // Predicated region
  $region22: #{network_block_forward.2} parent=0 // pred_check
    _
  $region23: #{network_block_forward.2} parent=0 // pred_check_branch
    %26 = sbr.rel (0) target = $region25
  $region24: #{network_block_forward.2} parent=0 // pred_region
    _
  $region25: #{network_block_forward.2} parent=0 // pred_fallthru
    _
  // Predicated region
  $region26: #{network_block_forward.2} parent=0 // pred_check
    _
  $region27: #{network_block_forward.2} parent=0 // pred_check_branch
    %28 = sbr.rel (0) target = $region29
  $region28: #{network_block_forward.2} parent=0 // pred_region
    _
  $region29: #{network_block_forward.2} parent=0 // pred_fallthru
    _
  // Predicated region
  $region30: #{network_block_forward.2} parent=0 // pred_check
    _
  $region31: #{network_block_forward.2} parent=0 // pred_check_branch
    %30 = sbr.rel (0) target = $region33
  $region32: #{network_block_forward.2} parent=0 // pred_region
    _
  $region33: #{network_block_forward.2} parent=0 // pred_fallthru
    _
  // Predicated region
  $region34: #{network_block_forward.2} parent=0 // pred_check
    _
  $region35: #{network_block_forward.2} parent=0 // pred_check_branch
    %32 = sbr.rel (0) target = $region37
  $region36: #{network_block_forward.2} parent=0 // pred_region
    _
  $region37: #{network_block_forward.2} parent=0 // pred_fallthru
    _
  // Predicated region
  $region38: #{network_block_forward.2} parent=0 // pred_check
    _
  $region39: #{network_block_forward.2} parent=0 // pred_check_branch
    %34 = sbr.rel (0) target = $region41
  $region40: #{network_block_forward.2} parent=0 // pred_region
    _
  $region41: #{network_block_forward.2} parent=0 // pred_fallthru
    _
  %v36 = vld [vmem:[%s0] sm:$0xff]
  %v37 = vld [vmem:[%s0 + $0x8] sm:$0xff]
  %v40 = vcombine.high %v36, %v36
  %v41 = vcombine.high %v37, %v37
  %vm44 = vcmask 1043456
  %v45 = vsel %vm44, %v36, 0.0
  %v46 = vsel %vm44, %v40, 0.0
  %v47 = vadd.f32 %v45, %v46
  %v48 = vsel %vm44, %v37, 0.0
  %v49 = vadd.f32 %v47, %v48
  %v50 = vsel %vm44, %v41, 0.0
  %v51 = vadd.f32 %v49, %v50
  %52 = vadd.xlane.f32.xlu0 %v51
  %v53 = vpop.xlane.xlu0 %52
  %v54 = vmul.f32 %v36, %v36
  %v55 = vmul.f32 %v37, %v37
  %v58 = vcombine.high %v54, %v54
  %v59 = vcombine.high %v55, %v55
  %v62 = vsel %vm44, %v54, 0.0
  %v63 = vsel %vm44, %v58, 0.0
  %v64 = vadd.f32 %v62, %v63
  %v65 = vsel %vm44, %v55, 0.0
  %v66 = vadd.f32 %v64, %v65
  %v67 = vsel %vm44, %v59, 0.0
  %v68 = vadd.f32 %v66, %v67
  %69 = vadd.xlane.f32.xlu0 %v68
  %v70 = vpop.xlane.xlu0 %69
  %v71 = vmul.f32 %v53, 0.001953125
  %v72 = vmul.f32 %v70, 0.001953125
  %v73 = vmul.f32 %v71, %v71
  %v74 = vsub.f32 %v72, %v73
  %v75 = vmax.f32 %v74, 0.0
  %v76 = vadd.f32 %v75, 1e-05
  %v77 = vrsqrt.pop %v76
  %v78 = vld [vmem:[%s3] sm:$0xf]
  %v79 = vmul.f32 %v77, %v78
  %v82 = vunpack.c.l.s4 839922192
  %v83 = vunpack.c.0.s8 %v82
  %v84 = vlaneseq
  %v85 = vshrl.u32 %v84, 7
  %v86 = vsub.s32 %v83, %v85
  %v87 = vrot.slane %v71, %v86
  %v89 = vsub.f32 %v36, %v87
  %v90 = vsub.f32 %v37, %v87
  %92 = vset.pattern.permute.xlu0 0
  %93 = vperm.xlu0 %92, %v79
  %v94 = vpop.permute.xlu0 %93
  %v96 = vunpack.c.l.s4 839922192
  %v97 = vunpack.c.0.s8 %v96
  %v98 = vlaneseq
  %v99 = vshrl.u32 %v98, 7
  %v100 = vsub.s32 %v97, %v99
  %v101 = vrot.slane %v94, %v100
  %v103 = vmul.f32 %v89, %v101
  %v104 = vmul.f32 %v90, %v101
  %v105 = vld [vmem:[%s4] sm:$0xf]
  %107 = vset.pattern.permute.xlu0 0
  %108 = vperm.xlu0 %107, %v105
  %v109 = vpop.permute.xlu0 %108
  %v111 = vunpack.c.l.s4 839922192
  %v112 = vunpack.c.0.s8 %v111
  %v113 = vlaneseq
  %v114 = vshrl.u32 %v113, 7
  %v115 = vsub.s32 %v112, %v114
  %v116 = vrot.slane %v109, %v115
  %v118 = vadd.f32 %v103, %v116
  %v119 = vadd.f32 %v104, %v116
  %v120 = vmax.f32 %v118, 0.0
  %v121 = vmax.f32 %v119, 0.0
  %v122 = vld [vmem:[%s1] sm:$0xff]
  %v123 = vld [vmem:[%s1 + $0x8] sm:$0xff]
  %v124 = vld [vmem:[%s1 + $0x10] sm:$0xff]
  %v125 = vld [vmem:[%s1 + $0x18] sm:$0xff]
  %v128 = vcombine.high %v120, %v120
  %v129 = vcombine.high %v121, %v121
  %132 = vrot.lane.b32.xlu0 %v120, 17
  %v133 = vpop.permute.xlu0 %132
  %134 = vrot.lane.b32.xlu0 %v128, 17
  %v135 = vpop.permute.xlu0 %134
  %136 = vrot.lane.b32.xlu0 %v121, 17
  %v137 = vpop.permute.xlu0 %136
  %138 = vrot.lane.b32.xlu0 %v129, 17
  %v139 = vpop.permute.xlu0 %138
  %v140 = vlaneseq
  %v141 = vand.u32 %v140, 127
  %vm142 = vcmp.lt.s32.totalorder %v141, 17
  %v143 = vsel %vm142, %v137, %v139
  %v144 = vsel %vm142, %v135, %v137
  %v145 = vsel %vm142, %v133, %v135
  %v146 = vsel %vm142, %v139, %v133
  %v147 = vlaneseq
  %v148 = vshrl.u32 %v147, 7
  %v149 = vsub.s32 0, %v148
  %v150 = vrot.slane %v122, %v149
  %v151 = vlaneseq
  %v152 = vshrl.u32 %v151, 7
  %v153 = vsub.s32 0, %v152
  %v154 = vrot.slane %v123, %v153
  %v155 = vlaneseq
  %v156 = vshrl.u32 %v155, 7
  %v157 = vsub.s32 0, %v156
  %v158 = vrot.slane %v124, %v157
  %v159 = vlaneseq
  %v160 = vshrl.u32 %v159, 7
  %v161 = vsub.s32 0, %v160
  %v162 = vrot.slane %v125, %v161
  %v163 = vmul.f32 %v146, %v150
  %v164 = vmul.f32 %v145, %v154
  %v165 = vmul.f32 %v144, %v158
  %v166 = vmul.f32 %v143, %v162
  %167 = vst [vmem:[#allocation2] sm:$0xf] %v163
  %168 = vst [vmem:[#allocation2 + $0x8] sm:$0xf] %v164
  %169 = vst [vmem:[#allocation2 + $0x10] sm:$0xf] %v165
  %170 = vst [vmem:[#allocation2 + $0x18] sm:$0xf] %v166
  %171 = vrot.lane.b32.xlu0 %v120, 16
  %v172 = vpop.permute.xlu0 %171
  %173 = vrot.lane.b32.xlu0 %v128, 16
  %v174 = vpop.permute.xlu0 %173
  %175 = vrot.lane.b32.xlu0 %v121, 16
  %v176 = vpop.permute.xlu0 %175
  %177 = vrot.lane.b32.xlu0 %v129, 16
  %v178 = vpop.permute.xlu0 %177
  %vm179 = vcmp.lt.s32.totalorder %v141, 16
  %v180 = vsel %vm179, %v176, %v178
  %v181 = vsel %vm179, %v174, %v176
  %v182 = vsel %vm179, %v172, %v174
  %v183 = vsel %vm179, %v178, %v172
  %v184 = vlaneseq
  %v185 = vshrl.u32 %v184, 7
  %v186 = vsub.s32 1, %v185
  %v187 = vrot.slane %v122, %v186
  %v188 = vlaneseq
  %v189 = vshrl.u32 %v188, 7
  %v190 = vsub.s32 1, %v189
  %v191 = vrot.slane %v123, %v190
  %v192 = vlaneseq
  %v193 = vshrl.u32 %v192, 7
  %v194 = vsub.s32 1, %v193
  %v195 = vrot.slane %v124, %v194
  %v196 = vlaneseq
  %v197 = vshrl.u32 %v196, 7
  %v198 = vsub.s32 1, %v197
  %v199 = vrot.slane %v125, %v198
  %v200 = vmul.f32 %v183, %v187
  %v201 = vmul.f32 %v182, %v191
  %v202 = vmul.f32 %v181, %v195
  %v203 = vmul.f32 %v180, %v199
  %v208 = vrot.slane %v200, 4
  %v209 = vrot.slane %v201, 4
  %v210 = vrot.slane %v202, 4
  %v211 = vrot.slane %v203, 4
  %216 = vst [vmem:[#allocation2] sm:$0xf0] %v208
  %217 = vst [vmem:[#allocation2 + $0x8] sm:$0xf0] %v209
  %218 = vst [vmem:[#allocation2 + $0x10] sm:$0xf0] %v210
  %219 = vst [vmem:[#allocation2 + $0x18] sm:$0xf0] %v211
  %220 = vrot.lane.b32.xlu0 %v120, 15
  %v221 = vpop.permute.xlu0 %220
  %222 = vrot.lane.b32.xlu0 %v128, 15
  %v223 = vpop.permute.xlu0 %222
  %224 = vrot.lane.b32.xlu0 %v121, 15
  %v225 = vpop.permute.xlu0 %224
  %226 = vrot.lane.b32.xlu0 %v129, 15
  %v227 = vpop.permute.xlu0 %226
  %vm228 = vcmp.lt.s32.totalorder %v141, 15
  %v229 = vsel %vm228, %v225, %v227
  %v230 = vsel %vm228, %v223, %v225
  %v231 = vsel %vm228, %v221, %v223
  %v232 = vsel %vm228, %v227, %v221
  %v233 = vlaneseq
  %v234 = vshrl.u32 %v233, 7
  %v235 = vsub.s32 2, %v234
  %v236 = vrot.slane %v122, %v235
  %v237 = vlaneseq
  %v238 = vshrl.u32 %v237, 7
  %v239 = vsub.s32 2, %v238
  %v240 = vrot.slane %v123, %v239
  %v241 = vlaneseq
  %v242 = vshrl.u32 %v241, 7
  %v243 = vsub.s32 2, %v242
  %v244 = vrot.slane %v124, %v243
  %v245 = vlaneseq
  %v246 = vshrl.u32 %v245, 7
  %v247 = vsub.s32 2, %v246
  %v248 = vrot.slane %v125, %v247
  %v249 = vmul.f32 %v232, %v236
  %v250 = vmul.f32 %v231, %v240
  %v251 = vmul.f32 %v230, %v244
  %v252 = vmul.f32 %v229, %v248
  %253 = vst [vmem:[#allocation2 + $0x20] sm:$0xf] %v249
  %254 = vst [vmem:[#allocation2 + $0x28] sm:$0xf] %v250
  %255 = vst [vmem:[#allocation2 + $0x30] sm:$0xf] %v251
  %256 = vst [vmem:[#allocation2 + $0x38] sm:$0xf] %v252
  %257 = vrot.lane.b32.xlu0 %v120, 1
  %v258 = vpop.permute.xlu0 %257
  %259 = vrot.lane.b32.xlu0 %v128, 1
  %v260 = vpop.permute.xlu0 %259
  %261 = vrot.lane.b32.xlu0 %v121, 1
  %v262 = vpop.permute.xlu0 %261
  %263 = vrot.lane.b32.xlu0 %v129, 1
  %v264 = vpop.permute.xlu0 %263
  %vm265 = vcmp.lt.s32.totalorder %v141, 1
  %v266 = vsel %vm265, %v262, %v264
  %v267 = vsel %vm265, %v260, %v262
  %v268 = vsel %vm265, %v258, %v260
  %v269 = vsel %vm265, %v264, %v258
  %v270 = vlaneseq
  %v271 = vshrl.u32 %v270, 7
  %v272 = vsub.s32 3, %v271
  %v273 = vrot.slane %v122, %v272
  %v274 = vlaneseq
  %v275 = vshrl.u32 %v274, 7
  %v276 = vsub.s32 3, %v275
  %v277 = vrot.slane %v123, %v276
  %v278 = vlaneseq
  %v279 = vshrl.u32 %v278, 7
  %v280 = vsub.s32 3, %v279
  %v281 = vrot.slane %v124, %v280
  %v282 = vlaneseq
  %v283 = vshrl.u32 %v282, 7
  %v284 = vsub.s32 3, %v283
  %v285 = vrot.slane %v125, %v284
  %v286 = vmul.f32 %v269, %v273
  %v287 = vmul.f32 %v268, %v277
  %v288 = vmul.f32 %v267, %v281
  %v289 = vmul.f32 %v266, %v285
  %v294 = vrot.slane %v286, 4
  %v295 = vrot.slane %v287, 4
  %v296 = vrot.slane %v288, 4
  %v297 = vrot.slane %v289, 4
  %302 = vst [vmem:[#allocation2 + $0x20] sm:$0xf0] %v294
  %303 = vst [vmem:[#allocation2 + $0x28] sm:$0xf0] %v295
  %304 = vst [vmem:[#allocation2 + $0x30] sm:$0xf0] %v296
  %305 = vst [vmem:[#allocation2 + $0x38] sm:$0xf0] %v297
  %306 = vst [vmem:[#allocation2 + $0x40] sm:$0xf] %v120
  %307 = vst [vmem:[#allocation2 + $0x48] sm:$0xf] %v128
  %308 = vst [vmem:[#allocation2 + $0x50] sm:$0xf] %v121
  %309 = vst [vmem:[#allocation2 + $0x58] sm:$0xf] %v129
  %310 = vrot.lane.b32.xlu0 %v120, 127
  %v311 = vpop.permute.xlu0 %310
  %312 = vrot.lane.b32.xlu0 %v128, 127
  %v313 = vpop.permute.xlu0 %312
  %314 = vrot.lane.b32.xlu0 %v121, 127
  %v315 = vpop.permute.xlu0 %314
  %316 = vrot.lane.b32.xlu0 %v129, 127
  %v317 = vpop.permute.xlu0 %316
  %vm318 = vcmp.lt.s32.totalorder %v141, 127
  %v319 = vsel %vm318, %v315, %v317
  %v320 = vsel %vm318, %v313, %v315
  %v321 = vsel %vm318, %v311, %v313
  %v322 = vsel %vm318, %v317, %v311
  %v323 = vlaneseq
  %v324 = vshrl.u32 %v323, 7
  %v325 = vsub.s32 4, %v324
  %v326 = vrot.slane %v122, %v325
  %v327 = vlaneseq
  %v328 = vshrl.u32 %v327, 7
  %v329 = vsub.s32 4, %v328
  %v330 = vrot.slane %v123, %v329
  %v331 = vlaneseq
  %v332 = vshrl.u32 %v331, 7
  %v333 = vsub.s32 4, %v332
  %v334 = vrot.slane %v124, %v333
  %v335 = vlaneseq
  %v336 = vshrl.u32 %v335, 7
  %v337 = vsub.s32 4, %v336
  %v338 = vrot.slane %v125, %v337
  %v339 = vmul.f32 %v321, %v326
  %v340 = vmul.f32 %v320, %v330
  %v341 = vmul.f32 %v319, %v334
  %v342 = vmul.f32 %v322, %v338
  %v347 = vrot.slane %v339, 4
  %v348 = vrot.slane %v340, 4
  %v349 = vrot.slane %v341, 4
  %v350 = vrot.slane %v342, 4
  %355 = vst [vmem:[#allocation2 + $0x40] sm:$0xf0] %v347
  %356 = vst [vmem:[#allocation2 + $0x48] sm:$0xf0] %v348
  %357 = vst [vmem:[#allocation2 + $0x50] sm:$0xf0] %v349
  %358 = vst [vmem:[#allocation2 + $0x58] sm:$0xf0] %v350
  %359 = vrot.lane.b32.xlu0 %v120, 113
  %v360 = vpop.permute.xlu0 %359
  %361 = vrot.lane.b32.xlu0 %v128, 113
  %v362 = vpop.permute.xlu0 %361
  %363 = vrot.lane.b32.xlu0 %v121, 113
  %v364 = vpop.permute.xlu0 %363
  %365 = vrot.lane.b32.xlu0 %v129, 113
  %v366 = vpop.permute.xlu0 %365
  %vm367 = vcmp.lt.s32.totalorder %v141, 113
  %v368 = vsel %vm367, %v364, %v366
  %v369 = vsel %vm367, %v362, %v364
  %v370 = vsel %vm367, %v360, %v362
  %v371 = vsel %vm367, %v366, %v360
  %v372 = vlaneseq
  %v373 = vshrl.u32 %v372, 7
  %v374 = vsub.s32 5, %v373
  %v375 = vrot.slane %v122, %v374
  %v376 = vlaneseq
  %v377 = vshrl.u32 %v376, 7
  %v378 = vsub.s32 5, %v377
  %v379 = vrot.slane %v123, %v378
  %v380 = vlaneseq
  %v381 = vshrl.u32 %v380, 7
  %v382 = vsub.s32 5, %v381
  %v383 = vrot.slane %v124, %v382
  %v384 = vlaneseq
  %v385 = vshrl.u32 %v384, 7
  %v386 = vsub.s32 5, %v385
  %v387 = vrot.slane %v125, %v386
  %v388 = vmul.f32 %v370, %v375
  %v389 = vmul.f32 %v369, %v379
  %v390 = vmul.f32 %v368, %v383
  %v391 = vmul.f32 %v371, %v387
  %392 = vst [vmem:[#allocation2 + $0x60] sm:$0xf] %v388
  %393 = vst [vmem:[#allocation2 + $0x68] sm:$0xf] %v389
  %394 = vst [vmem:[#allocation2 + $0x70] sm:$0xf] %v390
  %395 = vst [vmem:[#allocation2 + $0x78] sm:$0xf] %v391
  %396 = vrot.lane.b32.xlu0 %v120, 112
  %v397 = vpop.permute.xlu0 %396
  %398 = vrot.lane.b32.xlu0 %v128, 112
  %v399 = vpop.permute.xlu0 %398
  %400 = vrot.lane.b32.xlu0 %v121, 112
  %v401 = vpop.permute.xlu0 %400
  %402 = vrot.lane.b32.xlu0 %v129, 112
  %v403 = vpop.permute.xlu0 %402
  %vm404 = vcmp.lt.s32.totalorder %v141, 112
  %v405 = vsel %vm404, %v401, %v403
  %v406 = vsel %vm404, %v399, %v401
  %v407 = vsel %vm404, %v397, %v399
  %v408 = vsel %vm404, %v403, %v397
  %v409 = vlaneseq
  %v410 = vshrl.u32 %v409, 7
  %v411 = vsub.s32 6, %v410
  %v412 = vrot.slane %v122, %v411
  %v413 = vlaneseq
  %v414 = vshrl.u32 %v413, 7
  %v415 = vsub.s32 6, %v414
  %v416 = vrot.slane %v123, %v415
  %v417 = vlaneseq
  %v418 = vshrl.u32 %v417, 7
  %v419 = vsub.s32 6, %v418
  %v420 = vrot.slane %v124, %v419
  %v421 = vlaneseq
  %v422 = vshrl.u32 %v421, 7
  %v423 = vsub.s32 6, %v422
  %v424 = vrot.slane %v125, %v423
  %v425 = vmul.f32 %v407, %v412
  %v426 = vmul.f32 %v406, %v416
  %v427 = vmul.f32 %v405, %v420
  %v428 = vmul.f32 %v408, %v424
  %v433 = vrot.slane %v425, 4
  %v434 = vrot.slane %v426, 4
  %v435 = vrot.slane %v427, 4
  %v436 = vrot.slane %v428, 4
  %441 = vst [vmem:[#allocation2 + $0x60] sm:$0xf0] %v433
  %442 = vst [vmem:[#allocation2 + $0x68] sm:$0xf0] %v434
  %443 = vst [vmem:[#allocation2 + $0x70] sm:$0xf0] %v435
  %444 = vst [vmem:[#allocation2 + $0x78] sm:$0xf0] %v436
  %445 = vrot.lane.b32.xlu0 %v120, 111
  %v446 = vpop.permute.xlu0 %445
  %447 = vrot.lane.b32.xlu0 %v128, 111
  %v448 = vpop.permute.xlu0 %447
  %449 = vrot.lane.b32.xlu0 %v121, 111
  %v450 = vpop.permute.xlu0 %449
  %451 = vrot.lane.b32.xlu0 %v129, 111
  %v452 = vpop.permute.xlu0 %451
  %vm453 = vcmp.lt.s32.totalorder %v141, 111
  %v454 = vsel %vm453, %v450, %v452
  %v455 = vsel %vm453, %v448, %v450
  %v456 = vsel %vm453, %v446, %v448
  %v457 = vsel %vm453, %v452, %v446
  %v458 = vlaneseq
  %v459 = vshrl.u32 %v458, 7
  %v460 = vsub.s32 7, %v459
  %v461 = vrot.slane %v122, %v460
  %v462 = vlaneseq
  %v463 = vshrl.u32 %v462, 7
  %v464 = vsub.s32 7, %v463
  %v465 = vrot.slane %v123, %v464
  %v466 = vlaneseq
  %v467 = vshrl.u32 %v466, 7
  %v468 = vsub.s32 7, %v467
  %v469 = vrot.slane %v124, %v468
  %v470 = vlaneseq
  %v471 = vshrl.u32 %v470, 7
  %v472 = vsub.s32 7, %v471
  %v473 = vrot.slane %v125, %v472
  %v474 = vmul.f32 %v456, %v461
  %v475 = vmul.f32 %v455, %v465
  %v476 = vmul.f32 %v454, %v469
  %v477 = vmul.f32 %v457, %v473
  %478 = vst [vmem:[#allocation2 + $0x80] sm:$0xf] %v474
  %479 = vst [vmem:[#allocation2 + $0x88] sm:$0xf] %v475
  %480 = vst [vmem:[#allocation2 + $0x90] sm:$0xf] %v476
  %481 = vst [vmem:[#allocation2 + $0x98] sm:$0xf] %v477
  %v482 = vld [vmem:[%s5] sm:$0xf]
  %v483 = vld [vmem:[%s5 + $0x4] sm:$0xf]
  %v484 = vld [vmem:[#allocation2] sm:$0xff]
  %v485 = vld [vmem:[#allocation2 + $0x8] sm:$0xff]
  %v486 = vld [vmem:[#allocation2 + $0x10] sm:$0xff]
  %v487 = vld [vmem:[#allocation2 + $0x18] sm:$0xff]
  %v488 = vld [vmem:[#allocation2 + $0x20] sm:$0xff]
  %v489 = vld [vmem:[#allocation2 + $0x28] sm:$0xff]
  %v490 = vld [vmem:[#allocation2 + $0x30] sm:$0xff]
  %v491 = vld [vmem:[#allocation2 + $0x38] sm:$0xff]
  %v492 = vld [vmem:[#allocation2 + $0x40] sm:$0xff]
  %v493 = vld [vmem:[#allocation2 + $0x48] sm:$0xff]
  %v494 = vld [vmem:[#allocation2 + $0x50] sm:$0xff]
  %v495 = vld [vmem:[#allocation2 + $0x58] sm:$0xff]
  %v496 = vld [vmem:[#allocation2 + $0x60] sm:$0xff]
  %v497 = vld [vmem:[#allocation2 + $0x68] sm:$0xff]
  %v498 = vld [vmem:[#allocation2 + $0x70] sm:$0xff]
  %v499 = vld [vmem:[#allocation2 + $0x78] sm:$0xff]
  %v500 = vld [vmem:[#allocation2 + $0x80] sm:$0xf]
  %v501 = vld [vmem:[#allocation2 + $0x88] sm:$0xf]
  %v502 = vld [vmem:[#allocation2 + $0x90] sm:$0xf]
  %v503 = vld [vmem:[#allocation2 + $0x98] sm:$0xf]
  %v504 = vpack.c.bf16 %v488, %v484
  %v505 = vpack.c.bf16 %v489, %v485
  %v506 = vpack.c.bf16 %v490, %v486
  %v507 = vpack.c.bf16 %v491, %v487
  %v508 = vpack.c.bf16 %v496, %v492
  %v509 = vpack.c.bf16 %v497, %v493
  %v510 = vpack.c.bf16 %v498, %v494
  %v511 = vpack.c.bf16 %v499, %v495
  %v512 = vpack.c.bf16 %v500, %v500
  %v513 = vpack.c.bf16 %v501, %v501
  %v514 = vpack.c.bf16 %v502, %v502
  %v515 = vpack.c.bf16 %v503, %v503
  %v518 = vunpack.c.l.b16 %v482
  %v519 = vunpack.c.l.b16 %v483
  %v520 = vpack.c.b16 %v519, %v518
  %vm521 = vcmask 293888
  %v523 = vsel %vm521, %v520, 0
  %vm525 = vcmask 1041408
  %v527 = vsel %vm525, %v512, 0
  %v530 = vsel %vm525, %v513, 0
  %v533 = vsel %vm525, %v514, 0
  %v536 = vsel %vm525, %v515, 0
  %538 = vmatprep.subr.bf16.mxu0 %v505
  %539 = vmatpush1.bf16.msra.mxu0 %v504
  %540 = vmatprep.subr.bf16.mxu0 %v509
  %541 = vmatpush1.bf16.msra.mxu0 %v508
  %542 = vmatprep.subr.bf16.mxu0 %v530
  %543 = vmatpush1.bf16.msra.mxu0 %v527
  %544 = vmatprep.subr.bf16.mxu0 0
  %545 = vmatpush1.bf16.msra.mxu0 0
  %546 = vmatprep.subr.bf16.mxu0 0
  %547 = vmatpush1.bf16.msra.mxu0 0
  %548 = vmatprep.subr.bf16.mxu0 0
  %549 = vmatpush1.bf16.msra.mxu0 0
  %550 = vmatprep.subr.bf16.mxu0 0
  %551 = vmatpush1.bf16.msra.mxu0 0
  %552 = vmatprep.subr.bf16.mxu0 0
  %553 = vmatpush1.bf16.msra.mxu0 0
  %554 = vmatprep.subr.bf16.mxu0 0
  %555 = vmatpush1.bf16.msra.mxu0 0
  %556 = vmatprep.subr.bf16.mxu0 0
  %557 = vmatpush1.bf16.msra.mxu0 0
  %558 = vmatprep.subr.bf16.mxu0 0
  %559 = vmatpush1.bf16.msra.mxu0 0
  %560 = vmatprep.subr.bf16.mxu0 0
  %561 = vmatpush1.bf16.msra.mxu0 0
  %562 = vmatprep.subr.bf16.mxu0 0
  %563 = vmatpush1.bf16.msra.mxu0 0
  %564 = vmatprep.subr.bf16.mxu0 0
  %565 = vmatpush1.bf16.msra.mxu0 0
  %566 = vmatprep.subr.bf16.mxu0 0
  %567 = vmatpush1.bf16.msra.mxu0 0
  %568 = vmatprep.subr.bf16.mxu0 0
  %569 = vmatpush1.bf16.msra.mxu0 0
  %570 = vmatprep.mubr.bf16.mxu0 0
  %571 = vmatmul.mubr.bf16.gmra.mrb[0].mxu0 %v523
  %v572 = vpop.f32.mrb[0].mxu0
  %v573 = vadd.f32 0.0, %v572
  %v574 = vpop.f32.mrb[0].mxu0
  %v575 = vadd.f32 0.0, %v574
  %v576 = vpop.f32.mrb[0].mxu0
  %v577 = vadd.f32 0.0, %v576
  %v578 = vpop.f32.mrb[0].mxu0
  %v579 = vadd.f32 0.0, %v578
  %580 = vdwg.mxu0
  %581 = vmatprep.subr.bf16.mxu0 %v507
  %582 = vmatpush1.bf16.msra.mxu0 %v506
  %583 = vmatprep.subr.bf16.mxu0 %v511
  %584 = vmatpush1.bf16.msra.mxu0 %v510
  %585 = vmatprep.subr.bf16.mxu0 %v536
  %586 = vmatpush1.bf16.msra.mxu0 %v533
  %587 = vmatprep.subr.bf16.mxu0 0
  %588 = vmatpush1.bf16.msra.mxu0 0
  %589 = vmatprep.subr.bf16.mxu0 0
  %590 = vmatpush1.bf16.msra.mxu0 0
  %591 = vmatprep.subr.bf16.mxu0 0
  %592 = vmatpush1.bf16.msra.mxu0 0
  %593 = vmatprep.subr.bf16.mxu0 0
  %594 = vmatpush1.bf16.msra.mxu0 0
  %595 = vmatprep.subr.bf16.mxu0 0
  %596 = vmatpush1.bf16.msra.mxu0 0
  %597 = vmatprep.subr.bf16.mxu0 0
  %598 = vmatpush1.bf16.msra.mxu0 0
  %599 = vmatprep.subr.bf16.mxu0 0
  %600 = vmatpush1.bf16.msra.mxu0 0
  %601 = vmatprep.subr.bf16.mxu0 0
  %602 = vmatpush1.bf16.msra.mxu0 0
  %603 = vmatprep.subr.bf16.mxu0 0
  %604 = vmatpush1.bf16.msra.mxu0 0
  %605 = vmatprep.subr.bf16.mxu0 0
  %606 = vmatpush1.bf16.msra.mxu0 0
  %607 = vmatprep.subr.bf16.mxu0 0
  %608 = vmatpush1.bf16.msra.mxu0 0
  %609 = vmatprep.subr.bf16.mxu0 0
  %610 = vmatpush1.bf16.msra.mxu0 0
  %611 = vmatprep.subr.bf16.mxu0 0
  %612 = vmatpush1.bf16.msra.mxu0 0
  %613 = vmatprep.mubr.bf16.mxu0 0
  %614 = vmatmul.mubr.bf16.gmra.mrb[0].mxu0 %v523
  %v615 = vpop.f32.mrb[0].mxu0
  %v616 = vadd.f32 0.0, %v615
  %v617 = vpop.f32.mrb[0].mxu0
  %v618 = vadd.f32 0.0, %v617
  %v619 = vpop.f32.mrb[0].mxu0
  %v620 = vadd.f32 0.0, %v619
  %v621 = vpop.f32.mrb[0].mxu0
  %v622 = vadd.f32 0.0, %v621
  %623 = vdwg.mxu0
  %v624 = vld [vmem:[%s9] sm:$0xff]
  %v625 = vld [vmem:[%s9 + $0x8] sm:$0xff]
  %v626 = vld [vmem:[%s9 + $0x10] sm:$0xff]
  %v627 = vld [vmem:[%s9 + $0x18] sm:$0xff]
  %v628 = vld [vmem:[%s9 + $0x20] sm:$0xff]
  %v629 = vld [vmem:[%s9 + $0x28] sm:$0xff]
  %v630 = vld [vmem:[%s9 + $0x30] sm:$0xff]
  %v631 = vld [vmem:[%s9 + $0x38] sm:$0xff]
  %v632 = vld [vmem:[%s9 + $0x40] sm:$0xff]
  %v633 = vld [vmem:[%s9 + $0x48] sm:$0xff]
  %v634 = vld [vmem:[%s9 + $0x50] sm:$0xff]
  %v635 = vld [vmem:[%s9 + $0x58] sm:$0xff]
  %v636 = vld [vmem:[%s9 + $0x60] sm:$0xff]
  %v637 = vld [vmem:[%s9 + $0x68] sm:$0xff]
  %v638 = vld [vmem:[%s9 + $0x70] sm:$0xff]
  %v639 = vld [vmem:[%s9 + $0x78] sm:$0xff]
  %v640 = vld [vmem:[%s9 + $0x80] sm:$0xff]
  %v641 = vld [vmem:[%s9 + $0x88] sm:$0xff]
  %v642 = vld [vmem:[%s9 + $0x90] sm:$0xff]
  %v643 = vld [vmem:[%s9 + $0x98] sm:$0xff]
  %v644 = vld [vmem:[%s9 + $0xa0] sm:$0xff]
  %v645 = vld [vmem:[%s9 + $0xa8] sm:$0xff]
  %v646 = vld [vmem:[%s9 + $0xb0] sm:$0xff]
  %v647 = vld [vmem:[%s9 + $0xb8] sm:$0xff]
  %v648 = vld [vmem:[%s9 + $0xc0] sm:$0xff]
  %v649 = vld [vmem:[%s9 + $0xc8] sm:$0xff]
  %v650 = vld [vmem:[%s9 + $0xd0] sm:$0xff]
  %v651 = vld [vmem:[%s9 + $0xd8] sm:$0xff]
  %v652 = vld [vmem:[%s9 + $0xe0] sm:$0xff]
  %v653 = vld [vmem:[%s9 + $0xe8] sm:$0xff]
  %v654 = vld [vmem:[%s9 + $0xf0] sm:$0xff]
  %v655 = vld [vmem:[%s9 + $0xf8] sm:$0xff]
  %v656 = vld [vmem:[%s9 + $0x100] sm:$0xff]
  %v657 = vld [vmem:[%s9 + $0x108] sm:$0xff]
  %v658 = vld [vmem:[%s9 + $0x110] sm:$0xff]
  %v659 = vld [vmem:[%s9 + $0x118] sm:$0xff]
  %v660 = vld [vmem:[%s9 + $0x120] sm:$0xff]
  %v661 = vld [vmem:[%s9 + $0x128] sm:$0xff]
  %v662 = vld [vmem:[%s9 + $0x130] sm:$0xff]
  %v663 = vld [vmem:[%s9 + $0x138] sm:$0xff]
  %v664 = vld [vmem:[%s9 + $0x140] sm:$0xff]
  %v665 = vld [vmem:[%s9 + $0x148] sm:$0xff]
  %v666 = vld [vmem:[%s9 + $0x150] sm:$0xff]
  %v667 = vld [vmem:[%s9 + $0x158] sm:$0xff]
  %v668 = vld [vmem:[%s9 + $0x160] sm:$0xff]
  %v669 = vld [vmem:[%s9 + $0x168] sm:$0xff]
  %v670 = vld [vmem:[%s9 + $0x170] sm:$0xff]
  %v671 = vld [vmem:[%s9 + $0x178] sm:$0xff]
  %v672 = vld [vmem:[%s9 + $0x180] sm:$0xff]
  %v673 = vld [vmem:[%s9 + $0x188] sm:$0xff]
  %v674 = vld [vmem:[%s9 + $0x190] sm:$0xff]
  %v675 = vld [vmem:[%s9 + $0x198] sm:$0xff]
  %v676 = vld [vmem:[%s9 + $0x1a0] sm:$0xff]
  %v677 = vld [vmem:[%s9 + $0x1a8] sm:$0xff]
  %v678 = vld [vmem:[%s9 + $0x1b0] sm:$0xff]
  %v679 = vld [vmem:[%s9 + $0x1b8] sm:$0xff]
  %v680 = vld [vmem:[%s9 + $0x1c0] sm:$0xff]
  %v681 = vld [vmem:[%s9 + $0x1c8] sm:$0xff]
  %v682 = vld [vmem:[%s9 + $0x1d0] sm:$0xff]
  %v683 = vld [vmem:[%s9 + $0x1d8] sm:$0xff]
  %v684 = vld [vmem:[%s9 + $0x1e0] sm:$0xff]
  %v685 = vld [vmem:[%s9 + $0x1e8] sm:$0xff]
  %v686 = vld [vmem:[%s9 + $0x1f0] sm:$0xff]
  %v687 = vld [vmem:[%s9 + $0x1f8] sm:$0xff]
  %688 = vmatprep.subr.mxu0 0.0
  %689 = vmatpush1.msra.mxu0 %v624
  %690 = vmatprep.subr.mxu0 0.0
  %691 = vmatpush1.msra.mxu0 %v625
  %692 = vmatprep.subr.mxu0 0.0
  %693 = vmatpush1.msra.mxu0 %v626
  %694 = vmatprep.subr.mxu0 0.0
  %695 = vmatpush1.msra.mxu0 %v627
  %696 = vmatprep.subr.mxu0 0.0
  %697 = vmatpush1.msra.mxu0 %v628
  %698 = vmatprep.subr.mxu0 0.0
  %699 = vmatpush1.msra.mxu0 %v629
  %700 = vmatprep.subr.mxu0 0.0
  %701 = vmatpush1.msra.mxu0 %v630
  %702 = vmatprep.subr.mxu0 0.0
  %703 = vmatpush1.msra.mxu0 %v631
  %704 = vmatprep.subr.mxu0 0.0
  %705 = vmatpush1.msra.mxu0 %v632
  %706 = vmatprep.subr.mxu0 0.0
  %707 = vmatpush1.msra.mxu0 %v633
  %708 = vmatprep.subr.mxu0 0.0
  %709 = vmatpush1.msra.mxu0 %v634
  %710 = vmatprep.subr.mxu0 0.0
  %711 = vmatpush1.msra.mxu0 %v635
  %712 = vmatprep.subr.mxu0 0.0
  %713 = vmatpush1.msra.mxu0 %v636
  %714 = vmatprep.subr.mxu0 0.0
  %715 = vmatpush1.msra.mxu0 %v637
  %716 = vmatprep.subr.mxu0 0.0
  %717 = vmatpush1.msra.mxu0 %v638
  %718 = vmatprep.subr.mxu0 0.0
  %719 = vmatpush1.msra.mxu0 %v639
  %720 = vmatprep.subr.mxu0 0.0
  %721 = vmatpush1.msra.mxu0 %v640
  %722 = vmatprep.subr.mxu0 0.0
  %723 = vmatpush1.msra.mxu0 %v641
  %724 = vmatprep.subr.mxu0 0.0
  %725 = vmatpush1.msra.mxu0 %v642
  %726 = vmatprep.subr.mxu0 0.0
  %727 = vmatpush1.msra.mxu0 %v643
  %728 = vmatprep.subr.mxu0 0.0
  %729 = vmatpush1.msra.mxu0 %v644
  %730 = vmatprep.subr.mxu0 0.0
  %731 = vmatpush1.msra.mxu0 %v645
  %732 = vmatprep.subr.mxu0 0.0
  %733 = vmatpush1.msra.mxu0 %v646
  %734 = vmatprep.subr.mxu0 0.0
  %735 = vmatpush1.msra.mxu0 %v647
  %736 = vmatprep.subr.mxu0 0.0
  %737 = vmatpush1.msra.mxu0 %v648
  %738 = vmatprep.subr.mxu0 0.0
  %739 = vmatpush1.msra.mxu0 %v649
  %740 = vmatprep.subr.mxu0 0.0
  %741 = vmatpush1.msra.mxu0 %v650
  %742 = vmatprep.subr.mxu0 0.0
  %743 = vmatpush1.msra.mxu0 %v651
  %744 = vmatprep.subr.mxu0 0.0
  %745 = vmatpush1.msra.mxu0 %v652
  %746 = vmatprep.subr.mxu0 0.0
  %747 = vmatpush1.msra.mxu0 %v653
  %748 = vmatprep.subr.mxu0 0.0
  %749 = vmatpush1.msra.mxu0 %v654
  %750 = vmatprep.subr.mxu0 0.0
  %751 = vmatpush1.msra.mxu0 %v655
  %752 = vmatprep.mubr.f32.mxu0 %v575
  %753 = vmatmul.mubr.f32.gmra.mrb[0].mxu0 %v573
  %v754 = vpop.f32.mrb[0].mxu0
  %v755 = vadd.f32 0.0, %v754
  %v756 = vpop.f32.mrb[0].mxu0
  %757 = vmatprep.mubr.f32.mxu0 %v579
  %758 = vmatmul.mubr.f32.gmra.mrb[0].mxu0 %v577
  %v759 = vpop.f32.mrb[0].mxu0
  %v760 = vadd.f32 0.0, %v759
  %v761 = vpop.f32.mrb[0].mxu0
  %762 = vdwg.mxu0
  %763 = vmatprep.subr.mxu0 0.0
  %764 = vmatpush1.msra.mxu0 %v656
  %765 = vmatprep.subr.mxu0 0.0
  %766 = vmatpush1.msra.mxu0 %v657
  %767 = vmatprep.subr.mxu0 0.0
  %768 = vmatpush1.msra.mxu0 %v658
  %769 = vmatprep.subr.mxu0 0.0
  %770 = vmatpush1.msra.mxu0 %v659
  %771 = vmatprep.subr.mxu0 0.0
  %772 = vmatpush1.msra.mxu0 %v660
  %773 = vmatprep.subr.mxu0 0.0
  %774 = vmatpush1.msra.mxu0 %v661
  %775 = vmatprep.subr.mxu0 0.0
  %776 = vmatpush1.msra.mxu0 %v662
  %777 = vmatprep.subr.mxu0 0.0
  %778 = vmatpush1.msra.mxu0 %v663
  %779 = vmatprep.subr.mxu0 0.0
  %780 = vmatpush1.msra.mxu0 %v664
  %781 = vmatprep.subr.mxu0 0.0
  %782 = vmatpush1.msra.mxu0 %v665
  %783 = vmatprep.subr.mxu0 0.0
  %784 = vmatpush1.msra.mxu0 %v666
  %785 = vmatprep.subr.mxu0 0.0
  %786 = vmatpush1.msra.mxu0 %v667
  %787 = vmatprep.subr.mxu0 0.0
  %788 = vmatpush1.msra.mxu0 %v668
  %789 = vmatprep.subr.mxu0 0.0
  %790 = vmatpush1.msra.mxu0 %v669
  %791 = vmatprep.subr.mxu0 0.0
  %792 = vmatpush1.msra.mxu0 %v670
  %793 = vmatprep.subr.mxu0 0.0
  %794 = vmatpush1.msra.mxu0 %v671
  %795 = vmatprep.subr.mxu0 0.0
  %796 = vmatpush1.msra.mxu0 %v672
  %797 = vmatprep.subr.mxu0 0.0
  %798 = vmatpush1.msra.mxu0 %v673
  %799 = vmatprep.subr.mxu0 0.0
  %800 = vmatpush1.msra.mxu0 %v674
  %801 = vmatprep.subr.mxu0 0.0
  %802 = vmatpush1.msra.mxu0 %v675
  %803 = vmatprep.subr.mxu0 0.0
  %804 = vmatpush1.msra.mxu0 %v676
  %805 = vmatprep.subr.mxu0 0.0
  %806 = vmatpush1.msra.mxu0 %v677
  %807 = vmatprep.subr.mxu0 0.0
  %808 = vmatpush1.msra.mxu0 %v678
  %809 = vmatprep.subr.mxu0 0.0
  %810 = vmatpush1.msra.mxu0 %v679
  %811 = vmatprep.subr.mxu0 0.0
  %812 = vmatpush1.msra.mxu0 %v680
  %813 = vmatprep.subr.mxu0 0.0
  %814 = vmatpush1.msra.mxu0 %v681
  %815 = vmatprep.subr.mxu0 0.0
  %816 = vmatpush1.msra.mxu0 %v682
  %817 = vmatprep.subr.mxu0 0.0
  %818 = vmatpush1.msra.mxu0 %v683
  %819 = vmatprep.subr.mxu0 0.0
  %820 = vmatpush1.msra.mxu0 %v684
  %821 = vmatprep.subr.mxu0 0.0
  %822 = vmatpush1.msra.mxu0 %v685
  %823 = vmatprep.subr.mxu0 0.0
  %824 = vmatpush1.msra.mxu0 %v686
  %825 = vmatprep.subr.mxu0 0.0
  %826 = vmatpush1.msra.mxu0 %v687
  %827 = vmatprep.mubr.f32.mxu0 %v618
  %828 = vmatmul.mubr.f32.gmra.mrb[0].mxu0 %v616
  %v829 = vpop.f32.mrb[0].mxu0
  %v830 = vadd.f32 %v755, %v829
  %v831 = vpop.f32.mrb[0].mxu0
  %832 = vmatprep.mubr.f32.mxu0 %v622
  %833 = vmatmul.mubr.f32.gmra.mrb[0].mxu0 %v620
  %v834 = vpop.f32.mrb[0].mxu0
  %v835 = vadd.f32 %v760, %v834
  %v836 = vpop.f32.mrb[0].mxu0
  %837 = vdwg.mxu0
  %838 = vadd.xlane.f32.xlu0 %v830
  %v839 = vpop.xlane.xlu0 %838
  %v840 = vmul.f32 %v830, %v830
  %841 = vadd.xlane.f32.xlu0 %v840
  %v842 = vpop.xlane.xlu0 %841
  %v843 = vmul.f32 %v839, 0.0078125
  %v844 = vmul.f32 %v842, 0.0078125
  %v845 = vmul.f32 %v843, %v843
  %v846 = vsub.f32 %v844, %v845
  %v847 = vmax.f32 %v846, 0.0
  %v848 = vadd.f32 %v847, 1e-05
  %v849 = vrsqrt.pop %v848
  %v850 = vld [vmem:[%s6] sm:$0xff]
  %v851 = vmul.f32 %v849, %v850
  %v852 = vsub.f32 %v830, %v843
  %854 = vset.pattern.permute.xlu0 0
  %855 = vperm.xlu0 %854, %v851
  %v856 = vpop.permute.xlu0 %855
  %v858 = vmul.f32 %v852, %v856
  %v859 = vld [vmem:[%s7] sm:$0xff]
  %861 = vset.pattern.permute.xlu0 0
  %862 = vperm.xlu0 %861, %v859
  %v863 = vpop.permute.xlu0 %862
  %v865 = vadd.f32 %v858, %v863
  %v866 = vmax.f32 %v865, 0.0
  %v867 = vld [vmem:[%s2] sm:$0xff]
  %868 = vrot.lane.b32.xlu0 %v866, 9
  %v869 = vpop.permute.xlu0 %868
  %v870 = vlaneseq
  %v871 = vshrl.u32 %v870, 7
  %v872 = vsub.s32 0, %v871
  %v873 = vrot.slane %v867, %v872
  %v874 = vmul.f32 %v869, %v873
  %875 = vst [vmem:[#allocation3] sm:$0xff] %v874
  %876 = vrot.lane.b32.xlu0 %v866, 8
  %v877 = vpop.permute.xlu0 %876
  %v878 = vlaneseq
  %v879 = vshrl.u32 %v878, 7
  %v880 = vsub.s32 1, %v879
  %v881 = vrot.slane %v867, %v880
  %v882 = vmul.f32 %v877, %v881
  %883 = vst [vmem:[#allocation3 + $0x8] sm:$0xff] %v882
  %884 = vrot.lane.b32.xlu0 %v866, 7
  %v885 = vpop.permute.xlu0 %884
  %v886 = vlaneseq
  %v887 = vshrl.u32 %v886, 7
  %v888 = vsub.s32 2, %v887
  %v889 = vrot.slane %v867, %v888
  %v890 = vmul.f32 %v885, %v889
  %891 = vst [vmem:[#allocation3 + $0x10] sm:$0xff] %v890
  %892 = vrot.lane.b32.xlu0 %v866, 1
  %v893 = vpop.permute.xlu0 %892
  %v894 = vlaneseq
  %v895 = vshrl.u32 %v894, 7
  %v896 = vsub.s32 3, %v895
  %v897 = vrot.slane %v867, %v896
  %v898 = vmul.f32 %v893, %v897
  %899 = vst [vmem:[#allocation3 + $0x18] sm:$0xff] %v898
  %900 = vst [vmem:[#allocation3 + $0x20] sm:$0xff] %v866
  %901 = vrot.lane.b32.xlu0 %v866, 127
  %v902 = vpop.permute.xlu0 %901
  %v903 = vlaneseq
  %v904 = vshrl.u32 %v903, 7
  %v905 = vsub.s32 4, %v904
  %v906 = vrot.slane %v867, %v905
  %v907 = vmul.f32 %v902, %v906
  %908 = vst [vmem:[#allocation3 + $0x28] sm:$0xff] %v907
  %909 = vrot.lane.b32.xlu0 %v866, 121
  %v910 = vpop.permute.xlu0 %909
  %v911 = vlaneseq
  %v912 = vshrl.u32 %v911, 7
  %v913 = vsub.s32 5, %v912
  %v914 = vrot.slane %v867, %v913
  %v915 = vmul.f32 %v910, %v914
  %916 = vst [vmem:[#allocation3 + $0x30] sm:$0xff] %v915
  %917 = vrot.lane.b32.xlu0 %v866, 120
  %v918 = vpop.permute.xlu0 %917
  %v919 = vlaneseq
  %v920 = vshrl.u32 %v919, 7
  %v921 = vsub.s32 6, %v920
  %v922 = vrot.slane %v867, %v921
  %v923 = vmul.f32 %v918, %v922
  %924 = vst [vmem:[#allocation3 + $0x38] sm:$0xff] %v923
  %925 = vrot.lane.b32.xlu0 %v866, 119
  %v926 = vpop.permute.xlu0 %925
  %v927 = vlaneseq
  %v928 = vshrl.u32 %v927, 7
  %v929 = vsub.s32 7, %v928
  %v930 = vrot.slane %v867, %v929
  %v931 = vmul.f32 %v926, %v930
  %932 = vst [vmem:[#allocation3 + $0x40] sm:$0xff] %v931
  %v933 = vld [vmem:[%s8] sm:$0xf]
  %v934 = vld [vmem:[#allocation3] sm:$0xff]
  %v935 = vld [vmem:[#allocation3 + $0x8] sm:$0xff]
  %v936 = vld [vmem:[#allocation3 + $0x10] sm:$0xff]
  %v937 = vld [vmem:[#allocation3 + $0x18] sm:$0xff]
  %v938 = vld [vmem:[#allocation3 + $0x20] sm:$0xff]
  %v939 = vld [vmem:[#allocation3 + $0x28] sm:$0xff]
  %v940 = vld [vmem:[#allocation3 + $0x30] sm:$0xff]
  %v941 = vld [vmem:[#allocation3 + $0x38] sm:$0xff]
  %v942 = vld [vmem:[#allocation3 + $0x40] sm:$0xff]
  %v943 = vpack.c.bf16 %v935, %v934
  %v944 = vpack.c.bf16 %v937, %v936
  %v945 = vpack.c.bf16 %v939, %v938
  %v946 = vpack.c.bf16 %v941, %v940
  %v947 = vpack.c.bf16 %v942, %v942
  %vm948 = vcmask 588800
  %v950 = vsel %vm948, %v933, 0
  %v953 = vsel %vm44, %v947, 0
  %955 = vmatprep.subr.bf16.mxu0 0
  %956 = vmatpush1.bf16.msra.mxu0 %v943
  %957 = vmatprep.subr.bf16.mxu0 0
  %958 = vmatpush1.bf16.msra.mxu0 %v944
  %959 = vmatprep.subr.bf16.mxu0 0
  %960 = vmatpush1.bf16.msra.mxu0 %v945
  %961 = vmatprep.subr.bf16.mxu0 0
  %962 = vmatpush1.bf16.msra.mxu0 %v946
  %963 = vmatprep.subr.bf16.mxu0 0
  %964 = vmatpush1.bf16.msra.mxu0 %v953
  %965 = vmatprep.subr.bf16.mxu0 0
  %966 = vmatpush1.bf16.msra.mxu0 0
  %967 = vmatprep.subr.bf16.mxu0 0
  %968 = vmatpush1.bf16.msra.mxu0 0
  %969 = vmatprep.subr.bf16.mxu0 0
  %970 = vmatpush1.bf16.msra.mxu0 0
  %971 = vmatprep.subr.bf16.mxu0 0
  %972 = vmatpush1.bf16.msra.mxu0 0
  %973 = vmatprep.subr.bf16.mxu0 0
  %974 = vmatpush1.bf16.msra.mxu0 0
  %975 = vmatprep.subr.bf16.mxu0 0
  %976 = vmatpush1.bf16.msra.mxu0 0
  %977 = vmatprep.subr.bf16.mxu0 0
  %978 = vmatpush1.bf16.msra.mxu0 0
  %979 = vmatprep.subr.bf16.mxu0 0
  %980 = vmatpush1.bf16.msra.mxu0 0
  %981 = vmatprep.subr.bf16.mxu0 0
  %982 = vmatpush1.bf16.msra.mxu0 0
  %983 = vmatprep.subr.bf16.mxu0 0
  %984 = vmatpush1.bf16.msra.mxu0 0
  %985 = vmatprep.subr.bf16.mxu0 0
  %986 = vmatpush1.bf16.msra.mxu0 0
  %987 = vmatprep.mubr.bf16.mxu0 0
  %988 = vmatmul.mubr.bf16.gmra.mrb[0].mxu0 %v950
  %v989 = vpop.f32.mrb[0].mxu0
  %v990 = vadd.f32 0.0, %v989
  %v991 = vpop.f32.mrb[0].mxu0
  %v992 = vpop.f32.mrb[0].mxu0
  %v993 = vpop.f32.mrb[0].mxu0
  %994 = vdwg.mxu0
  %v995 = vadd.f32 %v835, %v990
  %996 = vst [vmem:[%s10] sm:$0xff] %v995
  // Predicated region
  $region42: #{network_block_forward.2} parent=0 // pred_check
    _
  $region43: #{network_block_forward.2} parent=0 // pred_check_branch
    %998 = sbr.rel (0) target = $region45
  $region44: #{network_block_forward.2} parent=0 // pred_region
    _
  $region45: #{network_block_forward.2} parent=0 // pred_fallthru
    _
  // Predicated region
  $region46: #{network_block_forward.2} parent=0 // pred_check
    _
  $region47: #{network_block_forward.2} parent=0 // pred_check_branch
    %1000 = sbr.rel (0) target = $region49
  $region48: #{network_block_forward.2} parent=0 // pred_region
    _
  $region49: #{network_block_forward.2} parent=0 // pred_fallthru
    _

</llo_original>
